<compile_context>
chip_gen: v5e
topology: v5e:2x2
jax: 0.10.0
libtpu: 0.0.40
codegen_flags: <defaults>
</compile_context>

<pallas_src>
import functools

import jax
import jax.numpy as jnp
from jax.experimental import pallas as pl
from jax.experimental.pallas import tpu as pltpu

SELU_ALPHA = 1.6732632423543772
SELU_SCALE = 1.0507009873554805
LEAKY_SLOPE = 0.2  # PyG GATConv default negative_slope


def _selu(x):
    return SELU_SCALE * jnp.where(x > 0, x, SELU_ALPHA * (jnp.exp(x) - 1.0))


def _leaky_relu(x):
    return jnp.where(x > 0, x, LEAKY_SLOPE * x)


# --------------------------------------------------------------------------------------
# Single fused kernel.
#   grid = (phase, row_block)   phase 0: GAT layer 1   phase 1: GAT layer 2 + pool + MLP
#   Scratch (persists across the grid) carries projections / scores / activations in VMEM.
# --------------------------------------------------------------------------------------
def fused_gat_kernel(
    # inputs
    x_ref, w1_ref, a1s_t_ref, a1d_ref, b1_ref,
    w2_ref, a2s_t_ref, a2d_ref, b2_ref,
    fc1w_ref, fc1b_ref, fc2w_ref, fc2b_ref,
    pool_ref, adj_ref,
    # output
    out_ref,
    # scratch
    wx1_ref, s1srcT_ref, s1dst_ref, h1_ref,
    wx2_ref, s2srcT_ref, s2dst_ref, h2_ref,
    *, heads, hidden, tm,
):
    phase = pl.program_id(0)      # 0: conv1, 1: conv_last (+ pool/MLP epilogue)
    i = pl.program_id(1)          # destination-node row block
    nblk = pl.num_programs(1)
    row0 = pl.multiple_of(i * tm, tm)

    # ---------------- per-phase prologue: full projection + attention scores (once) ----------------
    @pl.when((phase == 0) & (i == 0))
    def _():
        # x @ W1 -> [N, heads*hidden] (lane-dense 128 lanes at hidden=32, heads=4).
        wx = jnp.dot(x_ref[...], w1_ref[...], preferred_element_type=jnp.float32)
        wx1_ref[...] = wx
        # Per-head scores via block-diagonal attention matrices on the MXU.
        # s_srcT[h, j] = sum_c a_src[h, c] * wx[j, h*C + c]  (lhs @ rhs^T -> src axis on lanes)
        s1srcT_ref[...] = jax.lax.dot_general(
            a1s_t_ref[...], wx, (((1,), (1,)), ((), ())),
            preferred_element_type=jnp.float32)
        s1dst_ref[...] = jnp.dot(wx, a1d_ref[...], preferred_element_type=jnp.float32)

    @pl.when((phase == 1) & (i == 0))
    def _():
        wx2 = jnp.dot(h1_ref[...], w2_ref[...], preferred_element_type=jnp.float32)
        wx2_ref[...] = wx2
        s2srcT_ref[...] = jax.lax.dot_general(
            a2s_t_ref[...], wx2, (((1,), (1,)), ((), ())),
            preferred_element_type=jnp.float32)
        s2dst_ref[...] = jnp.dot(wx2, a2d_ref[...], preferred_element_type=jnp.float32)

    adj_blk = adj_ref[...].astype(jnp.float32)   # [tm, N] 0/1 mask, adj[i, j]=1 iff edge j->i (bf16 in HBM)

    # ---------------- phase 0: GATConv(in, hidden, heads=4, concat=False) + SELU ----------------
    @pl.when(phase == 0)
    def _():
        s_dst = s1dst_ref[pl.ds(row0, tm), :]                   # [tm, heads]
        acc = jnp.zeros((tm, hidden), jnp.float32)
        for h in range(heads):                                  # static unroll over heads
            logits = _leaky_relu(s_dst[:, h:h + 1] + s1srcT_ref[h:h + 1, :])   # [tm, N]
            # No -inf masking needed: the unmasked row-max only shifts numerator and denominator
            # identically, and *adj_blk zeros non-neighbors exactly.
            m = jnp.max(logits, axis=-1, keepdims=True)
            p = jnp.exp(logits - m) * adj_blk
            denom = jnp.maximum(jnp.sum(p, axis=-1, keepdims=True), 1e-30)  # self-loops keep this > 0
            attn = p / denom
            xh = wx1_ref[:, h * hidden:(h + 1) * hidden]                        # [N, hidden]
            acc = acc + jnp.dot(attn, xh, preferred_element_type=jnp.float32)   # [tm, hidden]
        out1 = _selu(acc * (1.0 / float(heads)) + b1_ref[...])   # concat=False: mean over heads
        h1_ref[pl.ds(row0, tm), :] = out1

    # ---------------- phase 1: GATConv(hidden, hidden, heads=1) + SELU, then pool + MLP ----------------
    @pl.when(phase == 1)
    def _():
        s_dst = s2dst_ref[pl.ds(row0, tm), :]                    # [tm, 1]
        logits = _leaky_relu(s_dst + s2srcT_ref[...])            # [tm, N]
        m = jnp.max(logits, axis=-1, keepdims=True)
        p = jnp.exp(logits - m) * adj_blk
        denom = jnp.maximum(jnp.sum(p, axis=-1, keepdims=True), 1e-30)
        attn = p / denom
        h2_blk = jnp.dot(attn, wx2_ref[...], preferred_element_type=jnp.float32)
        h2_ref[pl.ds(row0, tm), :] = _selu(h2_blk + b2_ref[...])

        @pl.when(i == nblk - 1)
        def _():
            # global_mean_pool as [B, N] @ [N, hidden] (VMEM resident), then selu(fc1) -> fc2.
            pooled = jnp.dot(pool_ref[...], h2_ref[...], preferred_element_type=jnp.float32)
            hfc = _selu(jnp.dot(pooled, fc1w_ref[...], preferred_element_type=jnp.float32)
                        + fc1b_ref[...])
            out = jnp.dot(hfc, fc2w_ref[...], preferred_element_type=jnp.float32) + fc2b_ref[...]
            out_ref[...] = out.astype(out_ref.dtype)


# --------------------------------------------------------------------------------------
# Wrapper: dense graph build (bf16 adjacency), block-diagonal attention matrices, one pallas_call.
# --------------------------------------------------------------------------------------
def _block_diag_att(a):
    """[heads, C] attention vector -> block-diagonal [heads*C, heads] so wx @ A = per-head scores."""
    heads, c = a.shape
    eye = jnp.eye(heads, dtype=a.dtype)
    return (a[:, :, None] * eye[:, None, :]).reshape(heads * c, heads)


def complex_gat_forward(params, features, edge_index, batch, *,
                        hidden_channels, heads, num_graphs, row_block=None):
    n, fin = features.shape
    out_channels = params["fc2_w"].shape[1]
    hc = heads * hidden_channels

    # Dense adjacency in bf16 (0/1 exactly representable) + [B, N] mean-pool matrix.
    src, dst = edge_index[0], edge_index[1]
    adj = jnp.zeros((n, n), jnp.float32).at[dst, src].set(1.0)     # adj[i, j]=1 iff edge j->i
    adj = jnp.maximum(adj, jnp.eye(n, dtype=jnp.float32))          # self-loops (PyG default)
    adj = adj.astype(jnp.bfloat16)
    one_hot = (batch[None, :] == jnp.arange(num_graphs)[:, None]).astype(jnp.float32)
    pool = one_hot / jnp.maximum(jnp.sum(one_hot, axis=1, keepdims=True), 1.0)   # [B, N]

    # Destination-row tile size: multiple of 16 sublanes (bf16 adj) or the full N.
    if row_block is None:
        row_block = n
        for cand in (512, 256, 128, 64, 32):
            if n % cand == 0:
                row_block = cand
                break
    assert n % row_block == 0, "num_nodes must be divisible by row_block"
    nblk = n // row_block

    # Block-diagonal attention matrices (host-side, tiny).
    a1s_t = _block_diag_att(params["a_src1"]).T      # [heads, heads*hidden]
    a1d = _block_diag_att(params["a_dst1"])          # [heads*hidden, heads]
    a2s_t = _block_diag_att(params["a_src2"]).T      # [1, hidden]
    a2d = _block_diag_att(params["a_dst2"])          # [hidden, 1]

    kern = functools.partial(fused_gat_kernel, heads=heads, hidden=hidden_channels, tm=row_block)

    def full(shape):  # whole-array (VMEM-resident) spec with constant block index
        return pl.BlockSpec(shape, lambda p, i, _s=len(shape): (0,) * _s)

    grid_spec = pltpu.PrefetchScalarGridSpec(
        num_scalar_prefetch=0,
        grid=(2, nblk),   # (layer phase, destination row block); last axis iterates fastest
        in_specs=[
            full((n, fin)),                                 # x
            full((fin, hc)),                                # w1
            full((heads, hc)),                              # a1_src (block-diag, transposed)
            full((hc, heads)),                              # a1_dst (block-diag)
            full((1, hidden_channels)),                     # b1
            full((hidden_channels, hidden_channels)),       # w2
            full((1, hidden_channels)),                     # a2_src (transposed)
            full((hidden_channels, 1)),                     # a2_dst
            full((1, hidden_channels)),                     # b2
            full(params["fc1_w"].shape),                    # fc1_w
            full(params["fc1_b"].shape),                    # fc1_b
            full(params["fc2_w"].shape),                    # fc2_w
            full(params["fc2_b"].shape),                    # fc2_b
            full((num_graphs, n)),                          # pool matrix [B, N]
            pl.BlockSpec((row_block, n), lambda p, i: (i, 0)),   # adj: tiled over destination rows
        ],
        out_specs=pl.BlockSpec((num_graphs, out_channels), lambda p, i: (0, 0)),
        scratch_shapes=[
            pltpu.VMEM((n, hc), jnp.float32),                 # wx1 = x @ W1
            pltpu.VMEM((heads, n), jnp.float32),              # layer-1 src scores (transposed)
            pltpu.VMEM((n, heads), jnp.float32),              # layer-1 dst scores
            pltpu.VMEM((n, hidden_channels), jnp.float32),    # h1 (layer-1 output)
            pltpu.VMEM((n, hidden_channels), jnp.float32),    # wx2 = h1 @ W2
            pltpu.VMEM((1, n), jnp.float32),                  # layer-2 src scores (transposed)
            pltpu.VMEM((n, 1), jnp.float32),                  # layer-2 dst scores
            pltpu.VMEM((n, hidden_channels), jnp.float32),    # h2 (layer-2 output)
        ],
    )

    return pl.pallas_call(
        kern,
        out_shape=jax.ShapeDtypeStruct((num_graphs, out_channels), jnp.float32),
        grid_spec=grid_spec,
        # Both axes are sequential: phase 1 consumes phase-0 results for *all* row blocks, and each
        # phase's full-graph projection is computed once at row block 0 (shared via VMEM scratch).
        # TODO(synk): a megacore-parallel row axis would need per-core partial pooling + a merge.
        compiler_params=pltpu.CompilerParams(
            dimension_semantics=("arbitrary", "arbitrary"),
            vmem_limit_bytes=32 * 1024 * 1024,
        ),
    )(features, params["w1"], a1s_t, a1d, params["b1"],
      params["w2"], a2s_t, a2d, params["b2"],
      params["fc1_w"], params["fc1_b"], params["fc2_w"], params["fc2_b"],
      pool, adj)


def init_params(key, in_channels, hidden_channels, out_channels, heads):
    ks = jax.random.split(key, 8)

    def glorot(k, shape):
        fan_in, fan_out = shape[-2], shape[-1]
        lim = jnp.sqrt(6.0 / (fan_in + fan_out))
        return jax.random.uniform(k, shape, jnp.float32, -lim, lim)

    return {
        # GATConv(in, hidden, heads=4, concat=False)
        "w1": glorot(ks[0], (in_channels, heads * hidden_channels)),
        "a_src1": glorot(ks[1], (heads, hidden_channels)),
        "a_dst1": glorot(ks[2], (heads, hidden_channels)),
        "b1": jnp.zeros((1, hidden_channels), jnp.float32),
        # GATConv(hidden, hidden, heads=1, concat=True)
        "w2": glorot(ks[3], (hidden_channels, hidden_channels)),
        "a_src2": glorot(ks[4], (1, hidden_channels)),
        "a_dst2": glorot(ks[5], (1, hidden_channels)),
        "b2": jnp.zeros((1, hidden_channels), jnp.float32),
        # fc1 / fc2
        "fc1_w": glorot(ks[6], (hidden_channels, hidden_channels // 2)),
        "fc1_b": jnp.zeros((1, hidden_channels // 2), jnp.float32),
        "fc2_w": glorot(ks[7], (hidden_channels // 2, out_channels)),
        "fc2_b": jnp.zeros((1, out_channels), jnp.float32),
    }


if __name__ == "__main__":
    in_channels, hidden_channels, out_channels, heads = 8, 32, 4, 4
    num_graphs = 2
    nodes_per_graph = 32
    num_nodes = num_graphs * nodes_per_graph   # 64 nodes -> 2 row blocks of 32

    key = jax.random.PRNGKey(0)
    k_feat, k_params = jax.random.split(key)
    features = jax.random.normal(k_feat, (num_nodes, in_channels), jnp.float32)

    # Deterministic graph: bidirectional ring within each graph.
    src_list, dst_list = [], []
    for g in range(num_graphs):
        base = g * nodes_per_graph
        for t in range(nodes_per_graph):
            a = base + t
            b = base + (t + 1) % nodes_per_graph
            src_list += [a, b]
            dst_list += [b, a]
    edge_index = jnp.array([src_list, dst_list], dtype=jnp.int32)                       # [2, 128]
    batch = jnp.repeat(jnp.arange(num_graphs, dtype=jnp.int32), nodes_per_graph)        # [64]

    params = init_params(k_params, in_channels, hidden_channels, out_channels, heads)

    fwd = jax.jit(functools.partial(
        complex_gat_forward, hidden_channels=hidden_channels, heads=heads,
        num_graphs=num_graphs, row_block=32))
    out = fwd(params, features, edge_index, batch)
    out = jax.block_until_ready(out)

    assert out.shape == (num_graphs, out_channels)
    assert bool(jnp.all(jnp.isfinite(out)))
    print("KERNEL_OK")
</pallas_src>

<mosaic_0001>
module attributes {stable_mosaic.version = 11 : i64} {
  func.func @fused_gat_kernel(%arg0: i32, %arg1: i32, %arg2: memref<64x8xf32, #tpu.memory_space<vmem>>, %arg3: memref<8x128xf32, #tpu.memory_space<vmem>>, %arg4: memref<4x128xf32, #tpu.memory_space<vmem>>, %arg5: memref<128x4xf32, #tpu.memory_space<vmem>>, %arg6: memref<1x32xf32, #tpu.memory_space<vmem>>, %arg7: memref<32x32xf32, #tpu.memory_space<vmem>>, %arg8: memref<1x32xf32, #tpu.memory_space<vmem>>, %arg9: memref<32x1xf32, #tpu.memory_space<vmem>>, %arg10: memref<1x32xf32, #tpu.memory_space<vmem>>, %arg11: memref<32x16xf32, #tpu.memory_space<vmem>>, %arg12: memref<1x16xf32, #tpu.memory_space<vmem>>, %arg13: memref<16x4xf32, #tpu.memory_space<vmem>>, %arg14: memref<1x4xf32, #tpu.memory_space<vmem>>, %arg15: memref<2x64xf32, #tpu.memory_space<vmem>>, %arg16: memref<32x64xbf16, #tpu.memory_space<vmem>>, %arg17: memref<2x4xf32, #tpu.memory_space<vmem>>, %arg18: memref<64x128xf32, #tpu.memory_space<vmem>>, %arg19: memref<4x64xf32, #tpu.memory_space<vmem>>, %arg20: memref<64x4xf32, #tpu.memory_space<vmem>>, %arg21: memref<64x32xf32, #tpu.memory_space<vmem>>, %arg22: memref<64x32xf32, #tpu.memory_space<vmem>>, %arg23: memref<1x64xf32, #tpu.memory_space<vmem>>, %arg24: memref<64x1xf32, #tpu.memory_space<vmem>>, %arg25: memref<64x32xf32, #tpu.memory_space<vmem>>) attributes {dimension_semantics = [#tpu.dimension_semantics<arbitrary>, #tpu.dimension_semantics<arbitrary>], iteration_bounds = array<i64: 2, 2>, scalar_prefetch = 0 : i64, scratch_operands = 8 : i64, tpu.core_type = #tpu.core_type<tc>, window_params = [{pipeline_mode = #tpu.pipeline_mode<synchronous>, transform_indices = @transform_0, window_bounds = array<i64: 64, 8>}, {pipeline_mode = #tpu.pipeline_mode<synchronous>, transform_indices = @transform_1, window_bounds = array<i64: 8, 128>}, {pipeline_mode = #tpu.pipeline_mode<synchronous>, transform_indices = @transform_2, window_bounds = array<i64: 4, 128>}, {pipeline_mode = #tpu.pipeline_mode<synchronous>, transform_indices = @transform_3, window_bounds = array<i64: 128, 4>}, {pipeline_mode = #tpu.pipeline_mode<synchronous>, transform_indices = @transform_4, window_bounds = array<i64: 1, 32>}, {pipeline_mode = #tpu.pipeline_mode<synchronous>, transform_indices = @transform_5, window_bounds = array<i64: 32, 32>}, {pipeline_mode = #tpu.pipeline_mode<synchronous>, transform_indices = @transform_6, window_bounds = array<i64: 1, 32>}, {pipeline_mode = #tpu.pipeline_mode<synchronous>, transform_indices = @transform_7, window_bounds = array<i64: 32, 1>}, {pipeline_mode = #tpu.pipeline_mode<synchronous>, transform_indices = @transform_8, window_bounds = array<i64: 1, 32>}, {pipeline_mode = #tpu.pipeline_mode<synchronous>, transform_indices = @transform_9, window_bounds = array<i64: 32, 16>}, {pipeline_mode = #tpu.pipeline_mode<synchronous>, transform_indices = @transform_10, window_bounds = array<i64: 1, 16>}, {pipeline_mode = #tpu.pipeline_mode<synchronous>, transform_indices = @transform_11, window_bounds = array<i64: 16, 4>}, {pipeline_mode = #tpu.pipeline_mode<synchronous>, transform_indices = @transform_12, window_bounds = array<i64: 1, 4>}, {pipeline_mode = #tpu.pipeline_mode<synchronous>, transform_indices = @transform_13, window_bounds = array<i64: 2, 64>}, {transform_indices = @transform_14, window_bounds = array<i64: 32, 64>}, {pipeline_mode = #tpu.pipeline_mode<synchronous>, transform_indices = @transform_15, window_bounds = array<i64: 2, 4>}]} {
    %c32_i32 = arith.constant 32 : i32
    %0 = arith.muli %arg1, %c32_i32 : i32
    %1 = tpu.assume_multiple %0, 32 : i32
    %c0_i32 = arith.constant 0 : i32
    %2 = arith.cmpi eq, %arg0, %c0_i32 : i32
    %c0_i32_0 = arith.constant 0 : i32
    %3 = arith.cmpi eq, %arg1, %c0_i32_0 : i32
    %4 = arith.andi %2, %3 : i1
    %5 = arith.extui %4 : i1 to i32
    %c0_i32_1 = arith.constant 0 : i32
    %6 = arith.cmpi ne, %5, %c0_i32_1 : i32
    scf.if %6 {
      %c0_9 = arith.constant 0 : index
      %c0_10 = arith.constant 0 : index
      %20 = vector.load %arg2[%c0_9, %c0_10] : memref<64x8xf32, #tpu.memory_space<vmem>>, vector<64x8xf32>
      %c0_11 = arith.constant 0 : index
      %c0_12 = arith.constant 0 : index
      %21 = vector.load %arg3[%c0_11, %c0_12] : memref<8x128xf32, #tpu.memory_space<vmem>>, vector<8x128xf32>
      %cst = arith.constant dense<0.000000e+00> : vector<64x128xf32>
      %22 = tpu.matmul %20, %21, %cst {dimension_numbers = #tpu.dot_dimension_numbers<[1], [0], [0], [1], [0, 0, 1, 1], [], []>} : vector<64x8xf32>, vector<8x128xf32>, vector<64x128xf32> -> vector<64x128xf32>
      %c0_13 = arith.constant 0 : index
      %c0_14 = arith.constant 0 : index
      %23 = vector.load %arg18[%c0_13, %c0_14] : memref<64x128xf32, #tpu.memory_space<vmem>>, vector<64x128xf32>
      tpu.vector_store %arg18[%c0_13, %c0_14], %22 {strides = array<i32>} : memref<64x128xf32, #tpu.memory_space<vmem>>, vector<64x128xf32>,
      %c0_15 = arith.constant 0 : index
      %c0_16 = arith.constant 0 : index
      %24 = vector.load %arg4[%c0_15, %c0_16] : memref<4x128xf32, #tpu.memory_space<vmem>>, vector<4x128xf32>
      %cst_17 = arith.constant dense<0.000000e+00> : vector<4x64xf32>
      %25 = tpu.matmul %24, %22, %cst_17 {dimension_numbers = #tpu.dot_dimension_numbers<[1], [1], [0], [0], [0, 0, 1, 0], [], []>} : vector<4x128xf32>, vector<64x128xf32>, vector<4x64xf32> -> vector<4x64xf32>
      %c0_18 = arith.constant 0 : index
      %c0_19 = arith.constant 0 : index
      %26 = vector.load %arg19[%c0_18, %c0_19] : memref<4x64xf32, #tpu.memory_space<vmem>>, vector<4x64xf32>
      tpu.vector_store %arg19[%c0_18, %c0_19], %25 {strides = array<i32>} : memref<4x64xf32, #tpu.memory_space<vmem>>, vector<4x64xf32>,
      %c0_20 = arith.constant 0 : index
      %c0_21 = arith.constant 0 : index
      %27 = vector.load %arg5[%c0_20, %c0_21] : memref<128x4xf32, #tpu.memory_space<vmem>>, vector<128x4xf32>
      %cst_22 = arith.constant dense<0.000000e+00> : vector<64x4xf32>
      %28 = tpu.matmul %22, %27, %cst_22 {dimension_numbers = #tpu.dot_dimension_numbers<[1], [0], [0], [1], [0, 0, 1, 1], [], []>} : vector<64x128xf32>, vector<128x4xf32>, vector<64x4xf32> -> vector<64x4xf32>
      %c0_23 = arith.constant 0 : index
      %c0_24 = arith.constant 0 : index
      %29 = vector.load %arg20[%c0_23, %c0_24] : memref<64x4xf32, #tpu.memory_space<vmem>>, vector<64x4xf32>
      tpu.vector_store %arg20[%c0_23, %c0_24], %28 {strides = array<i32>} : memref<64x4xf32, #tpu.memory_space<vmem>>, vector<64x4xf32>,
    } else {
    }
    %c1_i32 = arith.constant 1 : i32
    %7 = arith.cmpi eq, %arg0, %c1_i32 : i32
    %c0_i32_2 = arith.constant 0 : i32
    %8 = arith.cmpi eq, %arg1, %c0_i32_2 : i32
    %9 = arith.andi %7, %8 : i1
    %10 = arith.extui %9 : i1 to i32
    %c0_i32_3 = arith.constant 0 : i32
    %11 = arith.cmpi ne, %10, %c0_i32_3 : i32
    scf.if %11 {
      %c0_9 = arith.constant 0 : index
      %c0_10 = arith.constant 0 : index
      %20 = vector.load %arg21[%c0_9, %c0_10] : memref<64x32xf32, #tpu.memory_space<vmem>>, vector<64x32xf32>
      %c0_11 = arith.constant 0 : index
      %c0_12 = arith.constant 0 : index
      %21 = vector.load %arg7[%c0_11, %c0_12] : memref<32x32xf32, #tpu.memory_space<vmem>>, vector<32x32xf32>
      %cst = arith.constant dense<0.000000e+00> : vector<64x32xf32>
      %22 = tpu.matmul %20, %21, %cst {dimension_numbers = #tpu.dot_dimension_numbers<[1], [0], [0], [1], [0, 0, 1, 1], [], []>} : vector<64x32xf32>, vector<32x32xf32>, vector<64x32xf32> -> vector<64x32xf32>
      %c0_13 = arith.constant 0 : index
      %c0_14 = arith.constant 0 : index
      %23 = vector.load %arg22[%c0_13, %c0_14] : memref<64x32xf32, #tpu.memory_space<vmem>>, vector<64x32xf32>
      tpu.vector_store %arg22[%c0_13, %c0_14], %22 {strides = array<i32>} : memref<64x32xf32, #tpu.memory_space<vmem>>, vector<64x32xf32>,
      %c0_15 = arith.constant 0 : index
      %c0_16 = arith.constant 0 : index
      %24 = vector.load %arg8[%c0_15, %c0_16] : memref<1x32xf32, #tpu.memory_space<vmem>>, vector<1x32xf32>
      %cst_17 = arith.constant dense<0.000000e+00> : vector<1x64xf32>
      %25 = tpu.matmul %24, %22, %cst_17 {dimension_numbers = #tpu.dot_dimension_numbers<[1], [1], [0], [0], [0, 0, 1, 0], [], []>} : vector<1x32xf32>, vector<64x32xf32>, vector<1x64xf32> -> vector<1x64xf32>
      %c0_18 = arith.constant 0 : index
      %c0_19 = arith.constant 0 : index
      %26 = vector.load %arg23[%c0_18, %c0_19] : memref<1x64xf32, #tpu.memory_space<vmem>>, vector<1x64xf32>
      tpu.vector_store %arg23[%c0_18, %c0_19], %25 {strides = array<i32>} : memref<1x64xf32, #tpu.memory_space<vmem>>, vector<1x64xf32>,
      %c0_20 = arith.constant 0 : index
      %c0_21 = arith.constant 0 : index
      %27 = vector.load %arg9[%c0_20, %c0_21] : memref<32x1xf32, #tpu.memory_space<vmem>>, vector<32x1xf32>
      %cst_22 = arith.constant dense<0.000000e+00> : vector<64x1xf32>
      %28 = tpu.matmul %22, %27, %cst_22 {dimension_numbers = #tpu.dot_dimension_numbers<[1], [0], [0], [1], [0, 0, 1, 1], [], []>} : vector<64x32xf32>, vector<32x1xf32>, vector<64x1xf32> -> vector<64x1xf32>
      %c0_23 = arith.constant 0 : index
      %c0_24 = arith.constant 0 : index
      %29 = vector.load %arg24[%c0_23, %c0_24] : memref<64x1xf32, #tpu.memory_space<vmem>>, vector<64x1xf32>
      tpu.vector_store %arg24[%c0_23, %c0_24], %28 {strides = array<i32>} : memref<64x1xf32, #tpu.memory_space<vmem>>, vector<64x1xf32>,
    } else {
    }
    %c0 = arith.constant 0 : index
    %c0_4 = arith.constant 0 : index
    %12 = vector.load %arg16[%c0, %c0_4] : memref<32x64xbf16, #tpu.memory_space<vmem>>, vector<32x64xbf16>
    %13 = arith.extf %12 : vector<32x64xbf16> to vector<32x64xf32>
    %c0_i32_5 = arith.constant 0 : i32
    %14 = arith.cmpi eq, %arg0, %c0_i32_5 : i32
    %15 = arith.extui %14 : i1 to i32
    %c0_i32_6 = arith.constant 0 : i32
    %16 = arith.cmpi ne, %15, %c0_i32_6 : i32
    scf.if %16 {
      %20 = arith.index_cast %1 : i32 to index
      %c0_9 = arith.constant 0 : index
      %21 = vector.load %arg20[%20, %c0_9] : memref<64x4xf32, #tpu.memory_space<vmem>>, vector<32x4xf32>
      %cst = arith.constant 0.000000e+00 : f32
      %22 = vector.broadcast %cst : f32 to vector<32x32xf32>
      %23 = vector.extract_strided_slice %21 {offsets = [0, 0], sizes = [32, 1], strides = [1, 1]} : vector<32x4xf32> to vector<32x1xf32>
      %c0_10 = arith.constant 0 : index
      %c0_11 = arith.constant 0 : index
      %24 = vector.load %arg19[%c0_10, %c0_11] : memref<4x64xf32, #tpu.memory_space<vmem>>, vector<1x64xf32>
      %25 = vector.broadcast %23 : vector<32x1xf32> to vector<32x64xf32>
      %26 = vector.broadcast %24 : vector<1x64xf32> to vector<32x64xf32>
      %27 = arith.addf %25, %26 : vector<32x64xf32>
      %cst_12 = arith.constant 0.000000e+00 : f32
      %28 = vector.broadcast %cst_12 : f32 to vector<32x64xf32>
      %29 = arith.cmpf ogt, %27, %28 : vector<32x64xf32>
      %cst_13 = arith.constant 2.000000e-01 : f32
      %30 = vector.broadcast %cst_13 : f32 to vector<32x64xf32>
      %31 = arith.mulf %30, %27 : vector<32x64xf32>
      %32 = arith.select %29, %27, %31 : vector<32x64xi1>, vector<32x64xf32>
      %cst_14 = arith.constant dense<0xFF800000> : vector<32xf32>
      %33 = vector.multi_reduction <maximumf>, %32, %cst_14 [1] : vector<32x64xf32> to vector<32xf32>
      %34 = vector.shape_cast %33 : vector<32xf32> to vector<32x1xf32>
      %35 = vector.broadcast %34 : vector<32x1xf32> to vector<32x64xf32>
      %36 = arith.subf %32, %35 : vector<32x64xf32>
      %37 = math.exp %36 : vector<32x64xf32>
      %38 = arith.mulf %37, %13 : vector<32x64xf32>
      %cst_15 = arith.constant dense<0.000000e+00> : vector<32xf32>
      %39 = vector.multi_reduction <add>, %38, %cst_15 [1] : vector<32x64xf32> to vector<32xf32>
      %40 = vector.shape_cast %39 : vector<32xf32> to vector<32x1xf32>
      %cst_16 = arith.constant 1.000000e-30 : f32
      %41 = vector.broadcast %cst_16 : f32 to vector<32x1xf32>
      %42 = arith.maximumf %40, %41 : vector<32x1xf32>
      %43 = vector.broadcast %42 : vector<32x1xf32> to vector<32x64xf32>
      %44 = arith.divf %38, %43 : vector<32x64xf32>
      %c0_17 = arith.constant 0 : index
      %c0_18 = arith.constant 0 : index
      %45 = vector.load %arg18[%c0_17, %c0_18] : memref<64x128xf32, #tpu.memory_space<vmem>>, vector<64x32xf32>
      %cst_19 = arith.constant dense<0.000000e+00> : vector<32x32xf32>
      %46 = tpu.matmul %44, %45, %cst_19 {dimension_numbers = #tpu.dot_dimension_numbers<[1], [0], [0], [1], [0, 0, 1, 1], [], []>} : vector<32x64xf32>, vector<64x32xf32>, vector<32x32xf32> -> vector<32x32xf32>
      %47 = arith.addf %22, %46 : vector<32x32xf32>
      %48 = vector.extract_strided_slice %21 {offsets = [0, 1], sizes = [32, 1], strides = [1, 1]} : vector<32x4xf32> to vector<32x1xf32>
      %c1 = arith.constant 1 : index
      %c0_20 = arith.constant 0 : index
      %49 = vector.load %arg19[%c1, %c0_20] : memref<4x64xf32, #tpu.memory_space<vmem>>, vector<1x64xf32>
      %50 = vector.broadcast %48 : vector<32x1xf32> to vector<32x64xf32>
      %51 = vector.broadcast %49 : vector<1x64xf32> to vector<32x64xf32>
      %52 = arith.addf %50, %51 : vector<32x64xf32>
      %cst_21 = arith.constant 0.000000e+00 : f32
      %53 = vector.broadcast %cst_21 : f32 to vector<32x64xf32>
      %54 = arith.cmpf ogt, %52, %53 : vector<32x64xf32>
      %cst_22 = arith.constant 2.000000e-01 : f32
      %55 = vector.broadcast %cst_22 : f32 to vector<32x64xf32>
      %56 = arith.mulf %55, %52 : vector<32x64xf32>
      %57 = arith.select %54, %52, %56 : vector<32x64xi1>, vector<32x64xf32>
      %cst_23 = arith.constant dense<0xFF800000> : vector<32xf32>
      %58 = vector.multi_reduction <maximumf>, %57, %cst_23 [1] : vector<32x64xf32> to vector<32xf32>
      %59 = vector.shape_cast %58 : vector<32xf32> to vector<32x1xf32>
      %60 = vector.broadcast %59 : vector<32x1xf32> to vector<32x64xf32>
      %61 = arith.subf %57, %60 : vector<32x64xf32>
      %62 = math.exp %61 : vector<32x64xf32>
      %63 = arith.mulf %62, %13 : vector<32x64xf32>
      %cst_24 = arith.constant dense<0.000000e+00> : vector<32xf32>
      %64 = vector.multi_reduction <add>, %63, %cst_24 [1] : vector<32x64xf32> to vector<32xf32>
      %65 = vector.shape_cast %64 : vector<32xf32> to vector<32x1xf32>
      %cst_25 = arith.constant 1.000000e-30 : f32
      %66 = vector.broadcast %cst_25 : f32 to vector<32x1xf32>
      %67 = arith.maximumf %65, %66 : vector<32x1xf32>
      %68 = vector.broadcast %67 : vector<32x1xf32> to vector<32x64xf32>
      %69 = arith.divf %63, %68 : vector<32x64xf32>
      %c0_26 = arith.constant 0 : index
      %c32 = arith.constant 32 : index
      %70 = vector.load %arg18[%c0_26, %c32] : memref<64x128xf32, #tpu.memory_space<vmem>>, vector<64x32xf32>
      %cst_27 = arith.constant dense<0.000000e+00> : vector<32x32xf32>
      %71 = tpu.matmul %69, %70, %cst_27 {dimension_numbers = #tpu.dot_dimension_numbers<[1], [0], [0], [1], [0, 0, 1, 1], [], []>} : vector<32x64xf32>, vector<64x32xf32>, vector<32x32xf32> -> vector<32x32xf32>
      %72 = arith.addf %47, %71 : vector<32x32xf32>
      %73 = vector.extract_strided_slice %21 {offsets = [0, 2], sizes = [32, 1], strides = [1, 1]} : vector<32x4xf32> to vector<32x1xf32>
      %c2 = arith.constant 2 : index
      %c0_28 = arith.constant 0 : index
      %74 = vector.load %arg19[%c2, %c0_28] : memref<4x64xf32, #tpu.memory_space<vmem>>, vector<1x64xf32>
      %75 = vector.broadcast %73 : vector<32x1xf32> to vector<32x64xf32>
      %76 = vector.broadcast %74 : vector<1x64xf32> to vector<32x64xf32>
      %77 = arith.addf %75, %76 : vector<32x64xf32>
      %cst_29 = arith.constant 0.000000e+00 : f32
      %78 = vector.broadcast %cst_29 : f32 to vector<32x64xf32>
      %79 = arith.cmpf ogt, %77, %78 : vector<32x64xf32>
      %cst_30 = arith.constant 2.000000e-01 : f32
      %80 = vector.broadcast %cst_30 : f32 to vector<32x64xf32>
      %81 = arith.mulf %80, %77 : vector<32x64xf32>
      %82 = arith.select %79, %77, %81 : vector<32x64xi1>, vector<32x64xf32>
      %cst_31 = arith.constant dense<0xFF800000> : vector<32xf32>
      %83 = vector.multi_reduction <maximumf>, %82, %cst_31 [1] : vector<32x64xf32> to vector<32xf32>
      %84 = vector.shape_cast %83 : vector<32xf32> to vector<32x1xf32>
      %85 = vector.broadcast %84 : vector<32x1xf32> to vector<32x64xf32>
      %86 = arith.subf %82, %85 : vector<32x64xf32>
      %87 = math.exp %86 : vector<32x64xf32>
      %88 = arith.mulf %87, %13 : vector<32x64xf32>
      %cst_32 = arith.constant dense<0.000000e+00> : vector<32xf32>
      %89 = vector.multi_reduction <add>, %88, %cst_32 [1] : vector<32x64xf32> to vector<32xf32>
      %90 = vector.shape_cast %89 : vector<32xf32> to vector<32x1xf32>
      %cst_33 = arith.constant 1.000000e-30 : f32
      %91 = vector.broadcast %cst_33 : f32 to vector<32x1xf32>
      %92 = arith.maximumf %90, %91 : vector<32x1xf32>
      %93 = vector.broadcast %92 : vector<32x1xf32> to vector<32x64xf32>
      %94 = arith.divf %88, %93 : vector<32x64xf32>
      %c0_34 = arith.constant 0 : index
      %c64 = arith.constant 64 : index
      %95 = vector.load %arg18[%c0_34, %c64] : memref<64x128xf32, #tpu.memory_space<vmem>>, vector<64x32xf32>
      %cst_35 = arith.constant dense<0.000000e+00> : vector<32x32xf32>
      %96 = tpu.matmul %94, %95, %cst_35 {dimension_numbers = #tpu.dot_dimension_numbers<[1], [0], [0], [1], [0, 0, 1, 1], [], []>} : vector<32x64xf32>, vector<64x32xf32>, vector<32x32xf32> -> vector<32x32xf32>
      %97 = arith.addf %72, %96 : vector<32x32xf32>
      %98 = vector.extract_strided_slice %21 {offsets = [0, 3], sizes = [32, 1], strides = [1, 1]} : vector<32x4xf32> to vector<32x1xf32>
      %c3 = arith.constant 3 : index
      %c0_36 = arith.constant 0 : index
      %99 = vector.load %arg19[%c3, %c0_36] : memref<4x64xf32, #tpu.memory_space<vmem>>, vector<1x64xf32>
      %100 = vector.broadcast %98 : vector<32x1xf32> to vector<32x64xf32>
      %101 = vector.broadcast %99 : vector<1x64xf32> to vector<32x64xf32>
      %102 = arith.addf %100, %101 : vector<32x64xf32>
      %cst_37 = arith.constant 0.000000e+00 : f32
      %103 = vector.broadcast %cst_37 : f32 to vector<32x64xf32>
      %104 = arith.cmpf ogt, %102, %103 : vector<32x64xf32>
      %cst_38 = arith.constant 2.000000e-01 : f32
      %105 = vector.broadcast %cst_38 : f32 to vector<32x64xf32>
      %106 = arith.mulf %105, %102 : vector<32x64xf32>
      %107 = arith.select %104, %102, %106 : vector<32x64xi1>, vector<32x64xf32>
      %cst_39 = arith.constant dense<0xFF800000> : vector<32xf32>
      %108 = vector.multi_reduction <maximumf>, %107, %cst_39 [1] : vector<32x64xf32> to vector<32xf32>
      %109 = vector.shape_cast %108 : vector<32xf32> to vector<32x1xf32>
      %110 = vector.broadcast %109 : vector<32x1xf32> to vector<32x64xf32>
      %111 = arith.subf %107, %110 : vector<32x64xf32>
      %112 = math.exp %111 : vector<32x64xf32>
      %113 = arith.mulf %112, %13 : vector<32x64xf32>
      %cst_40 = arith.constant dense<0.000000e+00> : vector<32xf32>
      %114 = vector.multi_reduction <add>, %113, %cst_40 [1] : vector<32x64xf32> to vector<32xf32>
      %115 = vector.shape_cast %114 : vector<32xf32> to vector<32x1xf32>
      %cst_41 = arith.constant 1.000000e-30 : f32
      %116 = vector.broadcast %cst_41 : f32 to vector<32x1xf32>
      %117 = arith.maximumf %115, %116 : vector<32x1xf32>
      %118 = vector.broadcast %117 : vector<32x1xf32> to vector<32x64xf32>
      %119 = arith.divf %113, %118 : vector<32x64xf32>
      %c0_42 = arith.constant 0 : index
      %c96 = arith.constant 96 : index
      %120 = vector.load %arg18[%c0_42, %c96] : memref<64x128xf32, #tpu.memory_space<vmem>>, vector<64x32xf32>
      %cst_43 = arith.constant dense<0.000000e+00> : vector<32x32xf32>
      %121 = tpu.matmul %119, %120, %cst_43 {dimension_numbers = #tpu.dot_dimension_numbers<[1], [0], [0], [1], [0, 0, 1, 1], [], []>} : vector<32x64xf32>, vector<64x32xf32>, vector<32x32xf32> -> vector<32x32xf32>
      %122 = arith.addf %97, %121 : vector<32x32xf32>
      %cst_44 = arith.constant 2.500000e-01 : f32
      %123 = vector.broadcast %cst_44 : f32 to vector<32x32xf32>
      %124 = arith.mulf %122, %123 : vector<32x32xf32>
      %c0_45 = arith.constant 0 : index
      %c0_46 = arith.constant 0 : index
      %125 = vector.load %arg6[%c0_45, %c0_46] : memref<1x32xf32, #tpu.memory_space<vmem>>, vector<1x32xf32>
      %126 = vector.broadcast %125 : vector<1x32xf32> to vector<32x32xf32>
      %127 = arith.addf %124, %126 : vector<32x32xf32>
      %cst_47 = arith.constant 0.000000e+00 : f32
      %128 = vector.broadcast %cst_47 : f32 to vector<32x32xf32>
      %129 = arith.cmpf ogt, %127, %128 : vector<32x32xf32>
      %130 = math.exp %127 : vector<32x32xf32>
      %cst_48 = arith.constant 1.000000e+00 : f32
      %131 = vector.broadcast %cst_48 : f32 to vector<32x32xf32>
      %132 = arith.subf %130, %131 : vector<32x32xf32>
      %cst_49 = arith.constant 1.67326319 : f32
      %133 = vector.broadcast %cst_49 : f32 to vector<32x32xf32>
      %134 = arith.mulf %133, %132 : vector<32x32xf32>
      %135 = arith.select %129, %127, %134 : vector<32x32xi1>, vector<32x32xf32>
      %cst_50 = arith.constant 1.05070102 : f32
      %136 = vector.broadcast %cst_50 : f32 to vector<32x32xf32>
      %137 = arith.mulf %136, %135 : vector<32x32xf32>
      %138 = arith.index_cast %1 : i32 to index
      %c0_51 = arith.constant 0 : index
      %139 = vector.load %arg21[%138, %c0_51] : memref<64x32xf32, #tpu.memory_space<vmem>>, vector<32x32xf32>
      tpu.vector_store %arg21[%138, %c0_51], %137 {strides = array<i32>} : memref<64x32xf32, #tpu.memory_space<vmem>>, vector<32x32xf32>,
    } else {
    }
    %c1_i32_7 = arith.constant 1 : i32
    %17 = arith.cmpi eq, %arg0, %c1_i32_7 : i32
    %18 = arith.extui %17 : i1 to i32
    %c0_i32_8 = arith.constant 0 : i32
    %19 = arith.cmpi ne, %18, %c0_i32_8 : i32
    scf.if %19 {
      %20 = arith.index_cast %1 : i32 to index
      %c0_9 = arith.constant 0 : index
      %21 = vector.load %arg24[%20, %c0_9] : memref<64x1xf32, #tpu.memory_space<vmem>>, vector<32x1xf32>
      %c0_10 = arith.constant 0 : index
      %c0_11 = arith.constant 0 : index
      %22 = vector.load %arg23[%c0_10, %c0_11] : memref<1x64xf32, #tpu.memory_space<vmem>>, vector<1x64xf32>
      %23 = vector.broadcast %21 : vector<32x1xf32> to vector<32x64xf32>
      %24 = vector.broadcast %22 : vector<1x64xf32> to vector<32x64xf32>
      %25 = arith.addf %23, %24 : vector<32x64xf32>
      %cst = arith.constant 0.000000e+00 : f32
      %26 = vector.broadcast %cst : f32 to vector<32x64xf32>
      %27 = arith.cmpf ogt, %25, %26 : vector<32x64xf32>
      %cst_12 = arith.constant 2.000000e-01 : f32
      %28 = vector.broadcast %cst_12 : f32 to vector<32x64xf32>
      %29 = arith.mulf %28, %25 : vector<32x64xf32>
      %30 = arith.select %27, %25, %29 : vector<32x64xi1>, vector<32x64xf32>
      %cst_13 = arith.constant dense<0xFF800000> : vector<32xf32>
      %31 = vector.multi_reduction <maximumf>, %30, %cst_13 [1] : vector<32x64xf32> to vector<32xf32>
      %32 = vector.shape_cast %31 : vector<32xf32> to vector<32x1xf32>
      %33 = vector.broadcast %32 : vector<32x1xf32> to vector<32x64xf32>
      %34 = arith.subf %30, %33 : vector<32x64xf32>
      %35 = math.exp %34 : vector<32x64xf32>
      %36 = arith.mulf %35, %13 : vector<32x64xf32>
      %cst_14 = arith.constant dense<0.000000e+00> : vector<32xf32>
      %37 = vector.multi_reduction <add>, %36, %cst_14 [1] : vector<32x64xf32> to vector<32xf32>
      %38 = vector.shape_cast %37 : vector<32xf32> to vector<32x1xf32>
      %cst_15 = arith.constant 1.000000e-30 : f32
      %39 = vector.broadcast %cst_15 : f32 to vector<32x1xf32>
      %40 = arith.maximumf %38, %39 : vector<32x1xf32>
      %41 = vector.broadcast %40 : vector<32x1xf32> to vector<32x64xf32>
      %42 = arith.divf %36, %41 : vector<32x64xf32>
      %c0_16 = arith.constant 0 : index
      %c0_17 = arith.constant 0 : index
      %43 = vector.load %arg22[%c0_16, %c0_17] : memref<64x32xf32, #tpu.memory_space<vmem>>, vector<64x32xf32>
      %cst_18 = arith.constant dense<0.000000e+00> : vector<32x32xf32>
      %44 = tpu.matmul %42, %43, %cst_18 {dimension_numbers = #tpu.dot_dimension_numbers<[1], [0], [0], [1], [0, 0, 1, 1], [], []>} : vector<32x64xf32>, vector<64x32xf32>, vector<32x32xf32> -> vector<32x32xf32>
      %c0_19 = arith.constant 0 : index
      %c0_20 = arith.constant 0 : index
      %45 = vector.load %arg10[%c0_19, %c0_20] : memref<1x32xf32, #tpu.memory_space<vmem>>, vector<1x32xf32>
      %46 = vector.broadcast %45 : vector<1x32xf32> to vector<32x32xf32>
      %47 = arith.addf %44, %46 : vector<32x32xf32>
      %cst_21 = arith.constant 0.000000e+00 : f32
      %48 = vector.broadcast %cst_21 : f32 to vector<32x32xf32>
      %49 = arith.cmpf ogt, %47, %48 : vector<32x32xf32>
      %50 = math.exp %47 : vector<32x32xf32>
      %cst_22 = arith.constant 1.000000e+00 : f32
      %51 = vector.broadcast %cst_22 : f32 to vector<32x32xf32>
      %52 = arith.subf %50, %51 : vector<32x32xf32>
      %cst_23 = arith.constant 1.67326319 : f32
      %53 = vector.broadcast %cst_23 : f32 to vector<32x32xf32>
      %54 = arith.mulf %53, %52 : vector<32x32xf32>
      %55 = arith.select %49, %47, %54 : vector<32x32xi1>, vector<32x32xf32>
      %cst_24 = arith.constant 1.05070102 : f32
      %56 = vector.broadcast %cst_24 : f32 to vector<32x32xf32>
      %57 = arith.mulf %56, %55 : vector<32x32xf32>
      %58 = arith.index_cast %1 : i32 to index
      %c0_25 = arith.constant 0 : index
      %59 = vector.load %arg25[%58, %c0_25] : memref<64x32xf32, #tpu.memory_space<vmem>>, vector<32x32xf32>
      tpu.vector_store %arg25[%58, %c0_25], %57 {strides = array<i32>} : memref<64x32xf32, #tpu.memory_space<vmem>>, vector<32x32xf32>,
      %c1_i32_26 = arith.constant 1 : i32
      %60 = arith.cmpi eq, %arg1, %c1_i32_26 : i32
      %61 = arith.extui %60 : i1 to i32
      %c0_i32_27 = arith.constant 0 : i32
      %62 = arith.cmpi ne, %61, %c0_i32_27 : i32
      scf.if %62 {
        %c0_28 = arith.constant 0 : index
        %c0_29 = arith.constant 0 : index
        %63 = vector.load %arg15[%c0_28, %c0_29] : memref<2x64xf32, #tpu.memory_space<vmem>>, vector<2x64xf32>
        %c0_30 = arith.constant 0 : index
        %c0_31 = arith.constant 0 : index
        %64 = vector.load %arg25[%c0_30, %c0_31] : memref<64x32xf32, #tpu.memory_space<vmem>>, vector<64x32xf32>
        %cst_32 = arith.constant dense<0.000000e+00> : vector<2x32xf32>
        %65 = tpu.matmul %63, %64, %cst_32 {dimension_numbers = #tpu.dot_dimension_numbers<[1], [0], [0], [1], [0, 0, 1, 1], [], []>} : vector<2x64xf32>, vector<64x32xf32>, vector<2x32xf32> -> vector<2x32xf32>
        %c0_33 = arith.constant 0 : index
        %c0_34 = arith.constant 0 : index
        %66 = vector.load %arg11[%c0_33, %c0_34] : memref<32x16xf32, #tpu.memory_space<vmem>>, vector<32x16xf32>
        %cst_35 = arith.constant dense<0.000000e+00> : vector<2x16xf32>
        %67 = tpu.matmul %65, %66, %cst_35 {dimension_numbers = #tpu.dot_dimension_numbers<[1], [0], [0], [1], [0, 0, 1, 1], [], []>} : vector<2x32xf32>, vector<32x16xf32>, vector<2x16xf32> -> vector<2x16xf32>
        %c0_36 = arith.constant 0 : index
        %c0_37 = arith.constant 0 : index
        %68 = vector.load %arg12[%c0_36, %c0_37] : memref<1x16xf32, #tpu.memory_space<vmem>>, vector<1x16xf32>
        %69 = vector.broadcast %68 : vector<1x16xf32> to vector<2x16xf32>
        %70 = arith.addf %67, %69 : vector<2x16xf32>
        %cst_38 = arith.constant 0.000000e+00 : f32
        %71 = vector.broadcast %cst_38 : f32 to vector<2x16xf32>
        %72 = arith.cmpf ogt, %70, %71 : vector<2x16xf32>
        %73 = math.exp %70 : vector<2x16xf32>
        %cst_39 = arith.constant 1.000000e+00 : f32
        %74 = vector.broadcast %cst_39 : f32 to vector<2x16xf32>
        %75 = arith.subf %73, %74 : vector<2x16xf32>
        %cst_40 = arith.constant 1.67326319 : f32
        %76 = vector.broadcast %cst_40 : f32 to vector<2x16xf32>
        %77 = arith.mulf %76, %75 : vector<2x16xf32>
        %78 = arith.select %72, %70, %77 : vector<2x16xi1>, vector<2x16xf32>
        %cst_41 = arith.constant 1.05070102 : f32
        %79 = vector.broadcast %cst_41 : f32 to vector<2x16xf32>
        %80 = arith.mulf %79, %78 : vector<2x16xf32>
        %c0_42 = arith.constant 0 : index
        %c0_43 = arith.constant 0 : index
        %81 = vector.load %arg13[%c0_42, %c0_43] : memref<16x4xf32, #tpu.memory_space<vmem>>, vector<16x4xf32>
        %cst_44 = arith.constant dense<0.000000e+00> : vector<2x4xf32>
        %82 = tpu.matmul %80, %81, %cst_44 {dimension_numbers = #tpu.dot_dimension_numbers<[1], [0], [0], [1], [0, 0, 1, 1], [], []>} : vector<2x16xf32>, vector<16x4xf32>, vector<2x4xf32> -> vector<2x4xf32>
        %c0_45 = arith.constant 0 : index
        %c0_46 = arith.constant 0 : index
        %83 = vector.load %arg14[%c0_45, %c0_46] : memref<1x4xf32, #tpu.memory_space<vmem>>, vector<1x4xf32>
        %84 = vector.broadcast %83 : vector<1x4xf32> to vector<2x4xf32>
        %85 = arith.addf %82, %84 : vector<2x4xf32>
        %c0_47 = arith.constant 0 : index
        %c0_48 = arith.constant 0 : index
        %86 = vector.load %arg17[%c0_47, %c0_48] : memref<2x4xf32, #tpu.memory_space<vmem>>, vector<2x4xf32>
        tpu.vector_store %arg17[%c0_47, %c0_48], %85 {strides = array<i32>} : memref<2x4xf32, #tpu.memory_space<vmem>>, vector<2x4xf32>,
      } else {
      }
    } else {
    }
    return
  }
  func.func @transform_0(%arg0: i32, %arg1: i32) -> (i32, i32) {
    %c0_i32 = arith.constant 0 : i32
    %c0_i32_0 = arith.constant 0 : i32
    %c0_i32_1 = arith.constant 0 : i32
    return %c0_i32, %c0_i32_0 : i32, i32
  }
  func.func @transform_1(%arg0: i32, %arg1: i32) -> (i32, i32) {
    %c0_i32 = arith.constant 0 : i32
    %c0_i32_0 = arith.constant 0 : i32
    %c0_i32_1 = arith.constant 0 : i32
    return %c0_i32, %c0_i32_0 : i32, i32
  }
  func.func @transform_2(%arg0: i32, %arg1: i32) -> (i32, i32) {
    %c0_i32 = arith.constant 0 : i32
    %c0_i32_0 = arith.constant 0 : i32
    %c0_i32_1 = arith.constant 0 : i32
    return %c0_i32, %c0_i32_0 : i32, i32
  }
  func.func @transform_3(%arg0: i32, %arg1: i32) -> (i32, i32) {
    %c0_i32 = arith.constant 0 : i32
    %c0_i32_0 = arith.constant 0 : i32
    %c0_i32_1 = arith.constant 0 : i32
    return %c0_i32, %c0_i32_0 : i32, i32
  }
  func.func @transform_4(%arg0: i32, %arg1: i32) -> (i32, i32) {
    %c0_i32 = arith.constant 0 : i32
    %c0_i32_0 = arith.constant 0 : i32
    %c0_i32_1 = arith.constant 0 : i32
    return %c0_i32, %c0_i32_0 : i32, i32
  }
  func.func @transform_5(%arg0: i32, %arg1: i32) -> (i32, i32) {
    %c0_i32 = arith.constant 0 : i32
    %c0_i32_0 = arith.constant 0 : i32
    %c0_i32_1 = arith.constant 0 : i32
    return %c0_i32, %c0_i32_0 : i32, i32
  }
  func.func @transform_6(%arg0: i32, %arg1: i32) -> (i32, i32) {
    %c0_i32 = arith.constant 0 : i32
    %c0_i32_0 = arith.constant 0 : i32
    %c0_i32_1 = arith.constant 0 : i32
    return %c0_i32, %c0_i32_0 : i32, i32
  }
  func.func @transform_7(%arg0: i32, %arg1: i32) -> (i32, i32) {
    %c0_i32 = arith.constant 0 : i32
    %c0_i32_0 = arith.constant 0 : i32
    %c0_i32_1 = arith.constant 0 : i32
    return %c0_i32, %c0_i32_0 : i32, i32
  }
  func.func @transform_8(%arg0: i32, %arg1: i32) -> (i32, i32) {
    %c0_i32 = arith.constant 0 : i32
    %c0_i32_0 = arith.constant 0 : i32
    %c0_i32_1 = arith.constant 0 : i32
    return %c0_i32, %c0_i32_0 : i32, i32
  }
  func.func @transform_9(%arg0: i32, %arg1: i32) -> (i32, i32) {
    %c0_i32 = arith.constant 0 : i32
    %c0_i32_0 = arith.constant 0 : i32
    %c0_i32_1 = arith.constant 0 : i32
    return %c0_i32, %c0_i32_0 : i32, i32
  }
  func.func @transform_10(%arg0: i32, %arg1: i32) -> (i32, i32) {
    %c0_i32 = arith.constant 0 : i32
    %c0_i32_0 = arith.constant 0 : i32
    %c0_i32_1 = arith.constant 0 : i32
    return %c0_i32, %c0_i32_0 : i32, i32
  }
  func.func @transform_11(%arg0: i32, %arg1: i32) -> (i32, i32) {
    %c0_i32 = arith.constant 0 : i32
    %c0_i32_0 = arith.constant 0 : i32
    %c0_i32_1 = arith.constant 0 : i32
    return %c0_i32, %c0_i32_0 : i32, i32
  }
  func.func @transform_12(%arg0: i32, %arg1: i32) -> (i32, i32) {
    %c0_i32 = arith.constant 0 : i32
    %c0_i32_0 = arith.constant 0 : i32
    %c0_i32_1 = arith.constant 0 : i32
    return %c0_i32, %c0_i32_0 : i32, i32
  }
  func.func @transform_13(%arg0: i32, %arg1: i32) -> (i32, i32) {
    %c0_i32 = arith.constant 0 : i32
    %c0_i32_0 = arith.constant 0 : i32
    %c0_i32_1 = arith.constant 0 : i32
    return %c0_i32, %c0_i32_0 : i32, i32
  }
  func.func @transform_14(%arg0: i32, %arg1: i32) -> (i32, i32) {
    %c0_i32 = arith.constant 0 : i32
    %c0_i32_0 = arith.constant 0 : i32
    return %arg1, %c0_i32 : i32, i32
  }
  func.func @transform_15(%arg0: i32, %arg1: i32) -> (i32, i32) {
    %c0_i32 = arith.constant 0 : i32
    %c0_i32_0 = arith.constant 0 : i32
    %c0_i32_1 = arith.constant 0 : i32
    return %c0_i32, %c0_i32_0 : i32, i32
  }
}

</mosaic_0001>

<llo_original>
// kernel: complex_gat_forward.1
$region0: #{complex_gat_forward.1}
  #allocation0 [shape = 'u32[]', space=smem, size = 0x4, offset = 0x4, fixed_abs, tag = 'smem constant byte address 0x4 - core index']
  #allocation1 [shape = 'u32[72,128]{1,0:T(1,128)}', space=vmem, size = 0x9000, scoped, tag = 'internal scratch']
  #allocation2 [shape = 'f32[64,128]{1,0:T(8,128)}', space=vmem, size = 0x8000, scoped, tag = 'scratch operand']
  #allocation3 [shape = 'f32[4,64]{1,0:T(4,128)}', space=vmem, size = 0x800, scoped, tag = 'scratch operand']
  #allocation4 [shape = 'f32[64,4]{1,0:T(8,128)}', space=vmem, size = 0x8000, scoped, tag = 'scratch operand']
  #allocation5 [shape = 'f32[64,32]{1,0:T(8,128)}', space=vmem, size = 0x8000, scoped, tag = 'scratch operand']
  #allocation6 [shape = 'f32[64,32]{1,0:T(8,128)}', space=vmem, size = 0x8000, scoped, tag = 'scratch operand']
  #allocation7 [shape = 'f32[1,64]{1,0:T(1,128)}', space=vmem, size = 0x200, scoped, tag = 'scratch operand']
  #allocation8 [shape = 'f32[64,1]{1,0:T(8,128)}', space=vmem, size = 0x8000, scoped, tag = 'scratch operand']
  #allocation9 [shape = 'f32[64,32]{1,0:T(8,128)}', space=vmem, size = 0x8000, scoped, tag = 'scratch operand']
  %s0 = inlined_call_operand.vmem [shape: f32[64,8], index: 0, kind: input, shape index: {}]
  %s1 = inlined_call_operand.vmem [shape: f32[8,128], index: 1, kind: input, shape index: {}]
  %s2 = inlined_call_operand.vmem [shape: f32[4,128], index: 2, kind: input, shape index: {}]
  %s3 = inlined_call_operand.vmem [shape: f32[128,4], index: 3, kind: input, shape index: {}]
  %s4 = inlined_call_operand.vmem [shape: f32[1,32], index: 4, kind: input, shape index: {}]
  %s5 = inlined_call_operand.vmem [shape: f32[32,32], index: 5, kind: input, shape index: {}]
  %s6 = inlined_call_operand.vmem [shape: f32[1,32], index: 6, kind: input, shape index: {}]
  %s7 = inlined_call_operand.vmem [shape: f32[32,1], index: 7, kind: input, shape index: {}]
  %s8 = inlined_call_operand.vmem [shape: f32[1,32], index: 8, kind: input, shape index: {}]
  %s9 = inlined_call_operand.vmem [shape: f32[32,16], index: 9, kind: input, shape index: {}]
  %s10 = inlined_call_operand.vmem [shape: f32[1,16], index: 10, kind: input, shape index: {}]
  %s11 = inlined_call_operand.vmem [shape: f32[16,4], index: 11, kind: input, shape index: {}]
  %s12 = inlined_call_operand.vmem [shape: f32[1,4], index: 12, kind: input, shape index: {}]
  %s13 = inlined_call_operand.vmem [shape: f32[2,64], index: 13, kind: input, shape index: {}]
  %s14 = inlined_call_operand.vmem [shape: bf16[64,64], index: 14, kind: input, shape index: {}]
  %s15 = inlined_call_operand.hbm [shape: f32[2,4], index: 15, kind: output, shape index: {}]
  %s16 = sld [smem:[#allocation0]]
  $region113: #{complex_gat_forward.1} parent=0
    _
  %s18 = ssub.s32 1, %s16
  %s19 = scalar_select 0, %s18, %s16
  $region1: #{complex_gat_forward.1} parent=0
    #allocation10 [shape = 'u8[1024]{0}', space=vmem, size = 0x400, scoped, tag = 'output window, operand 0, single buffered']
    #allocation11 [shape = 's32[2]{0}', space=sflag, size = 0x8, scoped, tag = 'scoped memory for complex_gat_forward.1']
    %20 = vsyncpa [#allocation11], 0
    loop: start=0, step=1, limit=6
    $region2: #{complex_gat_forward.1} parent=1 // loop_pre_header
      _
    $region3: #{complex_gat_forward.1} parent=1 // loop_header
      %s22 = sphi 0, %s26
      %p23 = scmp.ge.s32.totalorder %s22, 6
      %s29 = sphi 0, %s41
      %s30 = sphi 0, %s37
      %s31 = sphi 0, %s29
      %s32 = sphi 0, %s30
      %s33 = sphi 0, %s31
      %s34 = sphi 0, %s32
      %s42 = sphi 0, %s42
      %s44 = sphi 0, %s42
      %s45 = sphi 0, %s44
      %s59 = sphi 0, %s45
      %s63 = sphi 0, %s63
      %s65 = sphi 0, %s63
      %s66 = sphi 0, %s65
      %s80 = sphi 0, %s66
      %s84 = sphi 0, %s84
      %s86 = sphi 0, %s84
      %s87 = sphi 0, %s86
      %s101 = sphi 0, %s87
      %s105 = sphi 0, %s105
      %s107 = sphi 0, %s105
      %s108 = sphi 0, %s107
      %s122 = sphi 0, %s108
      %s126 = sphi 0, %s126
      %s128 = sphi 0, %s126
      %s129 = sphi 0, %s128
      %s143 = sphi 0, %s129
      %s147 = sphi 0, %s147
      %s149 = sphi 0, %s147
      %s150 = sphi 0, %s149
      %s164 = sphi 0, %s150
      %s168 = sphi 0, %s168
      %s170 = sphi 0, %s168
      %s171 = sphi 0, %s170
      %s185 = sphi 0, %s171
      %s189 = sphi 0, %s189
      %s191 = sphi 0, %s189
      %s192 = sphi 0, %s191
      %s206 = sphi 0, %s192
      %s210 = sphi 0, %s210
      %s212 = sphi 0, %s210
      %s213 = sphi 0, %s212
      %s227 = sphi 0, %s213
      %s231 = sphi 0, %s231
      %s233 = sphi 0, %s231
      %s234 = sphi 0, %s233
      %s248 = sphi 0, %s234
      %s252 = sphi 0, %s252
      %s254 = sphi 0, %s252
      %s255 = sphi 0, %s254
      %s269 = sphi 0, %s255
      %s273 = sphi 0, %s273
      %s275 = sphi 0, %s273
      %s276 = sphi 0, %s275
      %s290 = sphi 0, %s276
      %s294 = sphi 0, %s294
      %s296 = sphi 0, %s294
      %s297 = sphi 0, %s296
      %s311 = sphi 0, %s297
      %s315 = sphi 0, %s315
      %s317 = sphi 0, %s315
      %s318 = sphi 0, %s317
      %s332 = sphi 0, %s318
      %s338 = sphi 0, %s340
      %s341 = sphi 0, %s338
      %s342 = sphi 0, %s341
      %s358 = sphi 0, %s342
      %s362 = sphi 0, %s362
      %s364 = sphi 0, %s362
      %s365 = sphi 0, %s364
      %s379 = sphi 0, %s365
    $region4: #{complex_gat_forward.1} parent=1 // loop_header_branch
      %25 = sbr.rel (%p23) target = $region8
    $region5: #{complex_gat_forward.1} parent=1 // loop_body
      %s27 = ssub.s32 %s22, 1
      %s28 = ssub.s32 %s22, 2
      %s35 = sadd.s32 1, %s30
      %p36 = scmp.ge.s32.totalorder %s35, 2
      %s37 = scalar_select %p36, 0, %s35
      %s38 = sadd.s32 1, %s29
      %s39 = scalar_select %p36, %s38, %s29
      %p40 = scmp.ge.s32.totalorder %s39, 2
      %s41 = scalar_select %p40, 0, %s39
      %s43 = sadd.s32 %s42, 1
      %p46 = scmp.eq.s32.totalorder %s22, 3
      %p47 = scmp.ne.s32.totalorder %s42, %s44
      %p48 = scmp.eq.s32.totalorder %s22, 0
      %p49 = por %p47, %p48
      %p50 = scmp.ne.s32.totalorder %s42, %s44
      %p51 = scmp.eq.s32.totalorder %s27, 3
      %p52 = por %p50, %p51
      %p53 = scmp.ne.s32.totalorder %s44, %s45
      %p54 = scmp.eq.s32.totalorder %s27, 0
      %p55 = por %p53, %p54
      %p56 = scmp.ne.s32.totalorder %s44, %s45
      %p57 = scmp.eq.s32.totalorder %s28, 3
      %p58 = por %p56, %p57
      %p60 = scmp.ne.s32.totalorder %s45, %s59
      %p61 = scmp.eq.s32.totalorder %s28, 0
      %p62 = por %p60, %p61
      %s64 = sadd.s32 %s63, 1
      %p67 = scmp.eq.s32.totalorder %s22, 3
      %p68 = scmp.ne.s32.totalorder %s63, %s65
      %p69 = scmp.eq.s32.totalorder %s22, 0
      %p70 = por %p68, %p69
      %p71 = scmp.ne.s32.totalorder %s63, %s65
      %p72 = scmp.eq.s32.totalorder %s27, 3
      %p73 = por %p71, %p72
      %p74 = scmp.ne.s32.totalorder %s65, %s66
      %p75 = scmp.eq.s32.totalorder %s27, 0
      %p76 = por %p74, %p75
      %p77 = scmp.ne.s32.totalorder %s65, %s66
      %p78 = scmp.eq.s32.totalorder %s28, 3
      %p79 = por %p77, %p78
      %p81 = scmp.ne.s32.totalorder %s66, %s80
      %p82 = scmp.eq.s32.totalorder %s28, 0
      %p83 = por %p81, %p82
      %s85 = sadd.s32 %s84, 1
      %p88 = scmp.eq.s32.totalorder %s22, 3
      %p89 = scmp.ne.s32.totalorder %s84, %s86
      %p90 = scmp.eq.s32.totalorder %s22, 0
      %p91 = por %p89, %p90
      %p92 = scmp.ne.s32.totalorder %s84, %s86
      %p93 = scmp.eq.s32.totalorder %s27, 3
      %p94 = por %p92, %p93
      %p95 = scmp.ne.s32.totalorder %s86, %s87
      %p96 = scmp.eq.s32.totalorder %s27, 0
      %p97 = por %p95, %p96
      %p98 = scmp.ne.s32.totalorder %s86, %s87
      %p99 = scmp.eq.s32.totalorder %s28, 3
      %p100 = por %p98, %p99
      %p102 = scmp.ne.s32.totalorder %s87, %s101
      %p103 = scmp.eq.s32.totalorder %s28, 0
      %p104 = por %p102, %p103
      %s106 = sadd.s32 %s105, 1
      %p109 = scmp.eq.s32.totalorder %s22, 3
      %p110 = scmp.ne.s32.totalorder %s105, %s107
      %p111 = scmp.eq.s32.totalorder %s22, 0
      %p112 = por %p110, %p111
      %p113 = scmp.ne.s32.totalorder %s105, %s107
      %p114 = scmp.eq.s32.totalorder %s27, 3
      %p115 = por %p113, %p114
      %p116 = scmp.ne.s32.totalorder %s107, %s108
      %p117 = scmp.eq.s32.totalorder %s27, 0
      %p118 = por %p116, %p117
      %p119 = scmp.ne.s32.totalorder %s107, %s108
      %p120 = scmp.eq.s32.totalorder %s28, 3
      %p121 = por %p119, %p120
      %p123 = scmp.ne.s32.totalorder %s108, %s122
      %p124 = scmp.eq.s32.totalorder %s28, 0
      %p125 = por %p123, %p124
      %s127 = sadd.s32 %s126, 1
      %p130 = scmp.eq.s32.totalorder %s22, 3
      %p131 = scmp.ne.s32.totalorder %s126, %s128
      %p132 = scmp.eq.s32.totalorder %s22, 0
      %p133 = por %p131, %p132
      %p134 = scmp.ne.s32.totalorder %s126, %s128
      %p135 = scmp.eq.s32.totalorder %s27, 3
      %p136 = por %p134, %p135
      %p137 = scmp.ne.s32.totalorder %s128, %s129
      %p138 = scmp.eq.s32.totalorder %s27, 0
      %p139 = por %p137, %p138
      %p140 = scmp.ne.s32.totalorder %s128, %s129
      %p141 = scmp.eq.s32.totalorder %s28, 3
      %p142 = por %p140, %p141
      %p144 = scmp.ne.s32.totalorder %s129, %s143
      %p145 = scmp.eq.s32.totalorder %s28, 0
      %p146 = por %p144, %p145
      %s148 = sadd.s32 %s147, 1
      %p151 = scmp.eq.s32.totalorder %s22, 3
      %p152 = scmp.ne.s32.totalorder %s147, %s149
      %p153 = scmp.eq.s32.totalorder %s22, 0
      %p154 = por %p152, %p153
      %p155 = scmp.ne.s32.totalorder %s147, %s149
      %p156 = scmp.eq.s32.totalorder %s27, 3
      %p157 = por %p155, %p156
      %p158 = scmp.ne.s32.totalorder %s149, %s150
      %p159 = scmp.eq.s32.totalorder %s27, 0
      %p160 = por %p158, %p159
      %p161 = scmp.ne.s32.totalorder %s149, %s150
      %p162 = scmp.eq.s32.totalorder %s28, 3
      %p163 = por %p161, %p162
      %p165 = scmp.ne.s32.totalorder %s150, %s164
      %p166 = scmp.eq.s32.totalorder %s28, 0
      %p167 = por %p165, %p166
      %s169 = sadd.s32 %s168, 1
      %p172 = scmp.eq.s32.totalorder %s22, 3
      %p173 = scmp.ne.s32.totalorder %s168, %s170
      %p174 = scmp.eq.s32.totalorder %s22, 0
      %p175 = por %p173, %p174
      %p176 = scmp.ne.s32.totalorder %s168, %s170
      %p177 = scmp.eq.s32.totalorder %s27, 3
      %p178 = por %p176, %p177
      %p179 = scmp.ne.s32.totalorder %s170, %s171
      %p180 = scmp.eq.s32.totalorder %s27, 0
      %p181 = por %p179, %p180
      %p182 = scmp.ne.s32.totalorder %s170, %s171
      %p183 = scmp.eq.s32.totalorder %s28, 3
      %p184 = por %p182, %p183
      %p186 = scmp.ne.s32.totalorder %s171, %s185
      %p187 = scmp.eq.s32.totalorder %s28, 0
      %p188 = por %p186, %p187
      %s190 = sadd.s32 %s189, 1
      %p193 = scmp.eq.s32.totalorder %s22, 3
      %p194 = scmp.ne.s32.totalorder %s189, %s191
      %p195 = scmp.eq.s32.totalorder %s22, 0
      %p196 = por %p194, %p195
      %p197 = scmp.ne.s32.totalorder %s189, %s191
      %p198 = scmp.eq.s32.totalorder %s27, 3
      %p199 = por %p197, %p198
      %p200 = scmp.ne.s32.totalorder %s191, %s192
      %p201 = scmp.eq.s32.totalorder %s27, 0
      %p202 = por %p200, %p201
      %p203 = scmp.ne.s32.totalorder %s191, %s192
      %p204 = scmp.eq.s32.totalorder %s28, 3
      %p205 = por %p203, %p204
      %p207 = scmp.ne.s32.totalorder %s192, %s206
      %p208 = scmp.eq.s32.totalorder %s28, 0
      %p209 = por %p207, %p208
      %s211 = sadd.s32 %s210, 1
      %p214 = scmp.eq.s32.totalorder %s22, 3
      %p215 = scmp.ne.s32.totalorder %s210, %s212
      %p216 = scmp.eq.s32.totalorder %s22, 0
      %p217 = por %p215, %p216
      %p218 = scmp.ne.s32.totalorder %s210, %s212
      %p219 = scmp.eq.s32.totalorder %s27, 3
      %p220 = por %p218, %p219
      %p221 = scmp.ne.s32.totalorder %s212, %s213
      %p222 = scmp.eq.s32.totalorder %s27, 0
      %p223 = por %p221, %p222
      %p224 = scmp.ne.s32.totalorder %s212, %s213
      %p225 = scmp.eq.s32.totalorder %s28, 3
      %p226 = por %p224, %p225
      %p228 = scmp.ne.s32.totalorder %s213, %s227
      %p229 = scmp.eq.s32.totalorder %s28, 0
      %p230 = por %p228, %p229
      %s232 = sadd.s32 %s231, 1
      %p235 = scmp.eq.s32.totalorder %s22, 3
      %p236 = scmp.ne.s32.totalorder %s231, %s233
      %p237 = scmp.eq.s32.totalorder %s22, 0
      %p238 = por %p236, %p237
      %p239 = scmp.ne.s32.totalorder %s231, %s233
      %p240 = scmp.eq.s32.totalorder %s27, 3
      %p241 = por %p239, %p240
      %p242 = scmp.ne.s32.totalorder %s233, %s234
      %p243 = scmp.eq.s32.totalorder %s27, 0
      %p244 = por %p242, %p243
      %p245 = scmp.ne.s32.totalorder %s233, %s234
      %p246 = scmp.eq.s32.totalorder %s28, 3
      %p247 = por %p245, %p246
      %p249 = scmp.ne.s32.totalorder %s234, %s248
      %p250 = scmp.eq.s32.totalorder %s28, 0
      %p251 = por %p249, %p250
      %s253 = sadd.s32 %s252, 1
      %p256 = scmp.eq.s32.totalorder %s22, 3
      %p257 = scmp.ne.s32.totalorder %s252, %s254
      %p258 = scmp.eq.s32.totalorder %s22, 0
      %p259 = por %p257, %p258
      %p260 = scmp.ne.s32.totalorder %s252, %s254
      %p261 = scmp.eq.s32.totalorder %s27, 3
      %p262 = por %p260, %p261
      %p263 = scmp.ne.s32.totalorder %s254, %s255
      %p264 = scmp.eq.s32.totalorder %s27, 0
      %p265 = por %p263, %p264
      %p266 = scmp.ne.s32.totalorder %s254, %s255
      %p267 = scmp.eq.s32.totalorder %s28, 3
      %p268 = por %p266, %p267
      %p270 = scmp.ne.s32.totalorder %s255, %s269
      %p271 = scmp.eq.s32.totalorder %s28, 0
      %p272 = por %p270, %p271
      %s274 = sadd.s32 %s273, 1
      %p277 = scmp.eq.s32.totalorder %s22, 3
      %p278 = scmp.ne.s32.totalorder %s273, %s275
      %p279 = scmp.eq.s32.totalorder %s22, 0
      %p280 = por %p278, %p279
      %p281 = scmp.ne.s32.totalorder %s273, %s275
      %p282 = scmp.eq.s32.totalorder %s27, 3
      %p283 = por %p281, %p282
      %p284 = scmp.ne.s32.totalorder %s275, %s276
      %p285 = scmp.eq.s32.totalorder %s27, 0
      %p286 = por %p284, %p285
      %p287 = scmp.ne.s32.totalorder %s275, %s276
      %p288 = scmp.eq.s32.totalorder %s28, 3
      %p289 = por %p287, %p288
      %p291 = scmp.ne.s32.totalorder %s276, %s290
      %p292 = scmp.eq.s32.totalorder %s28, 0
      %p293 = por %p291, %p292
      %s295 = sadd.s32 %s294, 1
      %p298 = scmp.eq.s32.totalorder %s22, 3
      %p299 = scmp.ne.s32.totalorder %s294, %s296
      %p300 = scmp.eq.s32.totalorder %s22, 0
      %p301 = por %p299, %p300
      %p302 = scmp.ne.s32.totalorder %s294, %s296
      %p303 = scmp.eq.s32.totalorder %s27, 3
      %p304 = por %p302, %p303
      %p305 = scmp.ne.s32.totalorder %s296, %s297
      %p306 = scmp.eq.s32.totalorder %s27, 0
      %p307 = por %p305, %p306
      %p308 = scmp.ne.s32.totalorder %s296, %s297
      %p309 = scmp.eq.s32.totalorder %s28, 3
      %p310 = por %p308, %p309
      %p312 = scmp.ne.s32.totalorder %s297, %s311
      %p313 = scmp.eq.s32.totalorder %s28, 0
      %p314 = por %p312, %p313
      %s316 = sadd.s32 %s315, 1
      %p319 = scmp.eq.s32.totalorder %s22, 3
      %p320 = scmp.ne.s32.totalorder %s315, %s317
      %p321 = scmp.eq.s32.totalorder %s22, 0
      %p322 = por %p320, %p321
      %p323 = scmp.ne.s32.totalorder %s315, %s317
      %p324 = scmp.eq.s32.totalorder %s27, 3
      %p325 = por %p323, %p324
      %p326 = scmp.ne.s32.totalorder %s317, %s318
      %p327 = scmp.eq.s32.totalorder %s27, 0
      %p328 = por %p326, %p327
      %p329 = scmp.ne.s32.totalorder %s317, %s318
      %p330 = scmp.eq.s32.totalorder %s28, 3
      %p331 = por %p329, %p330
      %p333 = scmp.ne.s32.totalorder %s318, %s332
      %p334 = scmp.eq.s32.totalorder %s28, 0
      %p335 = por %p333, %p334
      %s336 = ssub.s32 %s30, %s37
      %p337 = scmp.eq.s32.totalorder %s336, 0
      %s339 = sadd.s32 %s338, 1
      %s340 = scalar_select %p337, %s338, %s339
      %p343 = pneg %p337
      %p344 = scmp.eq.s32.totalorder %s22, 3
      %p345 = por %p343, %p344
      %p346 = scmp.ne.s32.totalorder %s338, %s341
      %p347 = scmp.eq.s32.totalorder %s22, 0
      %p348 = por %p346, %p347
      %p349 = scmp.ne.s32.totalorder %s338, %s341
      %p350 = scmp.eq.s32.totalorder %s27, 3
      %p351 = por %p349, %p350
      %p352 = scmp.ne.s32.totalorder %s341, %s342
      %p353 = scmp.eq.s32.totalorder %s27, 0
      %p354 = por %p352, %p353
      %p355 = scmp.ne.s32.totalorder %s341, %s342
      %p356 = scmp.eq.s32.totalorder %s28, 3
      %p357 = por %p355, %p356
      %p359 = scmp.ne.s32.totalorder %s342, %s358
      %p360 = scmp.eq.s32.totalorder %s28, 0
      %p361 = por %p359, %p360
      %s363 = sadd.s32 %s362, 1
      %p366 = scmp.eq.s32.totalorder %s22, 3
      %p367 = scmp.ne.s32.totalorder %s362, %s364
      %p368 = scmp.eq.s32.totalorder %s22, 0
      %p369 = por %p367, %p368
      %p370 = scmp.ne.s32.totalorder %s362, %s364
      %p371 = scmp.eq.s32.totalorder %s27, 3
      %p372 = por %p370, %p371
      %p373 = scmp.ne.s32.totalorder %s364, %s365
      %p374 = scmp.eq.s32.totalorder %s27, 0
      %p375 = por %p373, %p374
      %p376 = scmp.ne.s32.totalorder %s364, %s365
      %p377 = scmp.eq.s32.totalorder %s28, 3
      %p378 = por %p376, %p377
      %p380 = scmp.ne.s32.totalorder %s365, %s379
      %p381 = scmp.eq.s32.totalorder %s28, 0
      %p382 = por %p380, %p381
      %p383 = scmp.le.s32.totalorder 1, %s22
      %p384 = scmp.lt.s32.totalorder %s22, 5
      %p385 = pnand %p383, %p384
      %p386 = pneg %p385
      // Predicated region
      $region9: #{complex_gat_forward.1} parent=5 // pred_check
        _
      $region10: #{complex_gat_forward.1} parent=5 // pred_check_branch
        %388 = sbr.rel (%p385) target = $region12
      $region11: #{complex_gat_forward.1} parent=5 // pred_region
        %s389 = ssub.s32 %s22, 1
        // Predicated region
        $region13: #{complex_gat_forward.1} parent=11 // pred_check
          %p390 = pneg %p55
        $region14: #{complex_gat_forward.1} parent=11 // pred_check_branch
          %392 = sbr.rel (%p390) target = $region16
        $region15: #{complex_gat_forward.1} parent=11 // pred_region
          _
        $region16: #{complex_gat_forward.1} parent=11 // pred_fallthru
          _
        // Predicated region
        $region17: #{complex_gat_forward.1} parent=11 // pred_check
          %p393 = pneg %p76
        $region18: #{complex_gat_forward.1} parent=11 // pred_check_branch
          %395 = sbr.rel (%p393) target = $region20
        $region19: #{complex_gat_forward.1} parent=11 // pred_region
          _
        $region20: #{complex_gat_forward.1} parent=11 // pred_fallthru
          _
        // Predicated region
        $region21: #{complex_gat_forward.1} parent=11 // pred_check
          %p396 = pneg %p97
        $region22: #{complex_gat_forward.1} parent=11 // pred_check_branch
          %398 = sbr.rel (%p396) target = $region24
        $region23: #{complex_gat_forward.1} parent=11 // pred_region
          _
        $region24: #{complex_gat_forward.1} parent=11 // pred_fallthru
          _
        // Predicated region
        $region25: #{complex_gat_forward.1} parent=11 // pred_check
          %p399 = pneg %p118
        $region26: #{complex_gat_forward.1} parent=11 // pred_check_branch
          %401 = sbr.rel (%p399) target = $region28
        $region27: #{complex_gat_forward.1} parent=11 // pred_region
          _
        $region28: #{complex_gat_forward.1} parent=11 // pred_fallthru
          _
        // Predicated region
        $region29: #{complex_gat_forward.1} parent=11 // pred_check
          %p402 = pneg %p139
        $region30: #{complex_gat_forward.1} parent=11 // pred_check_branch
          %404 = sbr.rel (%p402) target = $region32
        $region31: #{complex_gat_forward.1} parent=11 // pred_region
          _
        $region32: #{complex_gat_forward.1} parent=11 // pred_fallthru
          _
        // Predicated region
        $region33: #{complex_gat_forward.1} parent=11 // pred_check
          %p405 = pneg %p160
        $region34: #{complex_gat_forward.1} parent=11 // pred_check_branch
          %407 = sbr.rel (%p405) target = $region36
        $region35: #{complex_gat_forward.1} parent=11 // pred_region
          _
        $region36: #{complex_gat_forward.1} parent=11 // pred_fallthru
          _
        // Predicated region
        $region37: #{complex_gat_forward.1} parent=11 // pred_check
          %p408 = pneg %p181
        $region38: #{complex_gat_forward.1} parent=11 // pred_check_branch
          %410 = sbr.rel (%p408) target = $region40
        $region39: #{complex_gat_forward.1} parent=11 // pred_region
          _
        $region40: #{complex_gat_forward.1} parent=11 // pred_fallthru
          _
        // Predicated region
        $region41: #{complex_gat_forward.1} parent=11 // pred_check
          %p411 = pneg %p202
        $region42: #{complex_gat_forward.1} parent=11 // pred_check_branch
          %413 = sbr.rel (%p411) target = $region44
        $region43: #{complex_gat_forward.1} parent=11 // pred_region
          _
        $region44: #{complex_gat_forward.1} parent=11 // pred_fallthru
          _
        // Predicated region
        $region45: #{complex_gat_forward.1} parent=11 // pred_check
          %p414 = pneg %p223
        $region46: #{complex_gat_forward.1} parent=11 // pred_check_branch
          %416 = sbr.rel (%p414) target = $region48
        $region47: #{complex_gat_forward.1} parent=11 // pred_region
          _
        $region48: #{complex_gat_forward.1} parent=11 // pred_fallthru
          _
        // Predicated region
        $region49: #{complex_gat_forward.1} parent=11 // pred_check
          %p417 = pneg %p244
        $region50: #{complex_gat_forward.1} parent=11 // pred_check_branch
          %419 = sbr.rel (%p417) target = $region52
        $region51: #{complex_gat_forward.1} parent=11 // pred_region
          _
        $region52: #{complex_gat_forward.1} parent=11 // pred_fallthru
          _
        // Predicated region
        $region53: #{complex_gat_forward.1} parent=11 // pred_check
          %p420 = pneg %p265
        $region54: #{complex_gat_forward.1} parent=11 // pred_check_branch
          %422 = sbr.rel (%p420) target = $region56
        $region55: #{complex_gat_forward.1} parent=11 // pred_region
          _
        $region56: #{complex_gat_forward.1} parent=11 // pred_fallthru
          _
        // Predicated region
        $region57: #{complex_gat_forward.1} parent=11 // pred_check
          %p423 = pneg %p286
        $region58: #{complex_gat_forward.1} parent=11 // pred_check_branch
          %425 = sbr.rel (%p423) target = $region60
        $region59: #{complex_gat_forward.1} parent=11 // pred_region
          _
        $region60: #{complex_gat_forward.1} parent=11 // pred_fallthru
          _
        // Predicated region
        $region61: #{complex_gat_forward.1} parent=11 // pred_check
          %p426 = pneg %p307
        $region62: #{complex_gat_forward.1} parent=11 // pred_check_branch
          %428 = sbr.rel (%p426) target = $region64
        $region63: #{complex_gat_forward.1} parent=11 // pred_region
          _
        $region64: #{complex_gat_forward.1} parent=11 // pred_fallthru
          _
        // Predicated region
        $region65: #{complex_gat_forward.1} parent=11 // pred_check
          %p429 = pneg %p328
        $region66: #{complex_gat_forward.1} parent=11 // pred_check_branch
          %431 = sbr.rel (%p429) target = $region68
        $region67: #{complex_gat_forward.1} parent=11 // pred_region
          _
        $region68: #{complex_gat_forward.1} parent=11 // pred_fallthru
          _
      $region12: #{complex_gat_forward.1} parent=5 // pred_fallthru
        _
      %p432 = scmp.lt.s32.totalorder %s22, 4
      // Predicated region
      $region69: #{complex_gat_forward.1} parent=5 // pred_check
        %p433 = pneg %p432
      $region70: #{complex_gat_forward.1} parent=5 // pred_check_branch
        %435 = sbr.rel (%p433) target = $region72
      $region71: #{complex_gat_forward.1} parent=5 // pred_region
        // Predicated region
        $region73: #{complex_gat_forward.1} parent=71 // pred_check
          %p436 = pneg %p348
        $region74: #{complex_gat_forward.1} parent=71 // pred_check_branch
          %438 = sbr.rel (%p436) target = $region76
        $region75: #{complex_gat_forward.1} parent=71 // pred_region
          %s439 = smul.u32 4, %s30
          %p440 = scmp.lt.s32.totalorder %s439, 7
          %s441 = scalar_select %p440, %s439, 7
          %s442 = smul.addr %s441, 4
          %s443 = scalar_lea.vmem %s14, %s442
          %s444 = smul.u32 4, %s30
        $region76: #{complex_gat_forward.1} parent=71 // pred_fallthru
          _
      $region72: #{complex_gat_forward.1} parent=5 // pred_fallthru
        _
      %p445 = scmp.le.s32.totalorder 1, %s22
      %p446 = scmp.lt.s32.totalorder %s22, 5
      %p447 = pnand %p445, %p446
      %p448 = pneg %p447
      // Predicated region
      $region77: #{complex_gat_forward.1} parent=5 // pred_check
        _
      $region78: #{complex_gat_forward.1} parent=5 // pred_check_branch
        %450 = sbr.rel (%p447) target = $region80
      $region79: #{complex_gat_forward.1} parent=5 // pred_region
        %s451 = ssub.s32 %s22, 1
        %p452 = pneg %p55
        %p453 = pneg %p52
        %p454 = pneg %p76
        %p455 = pneg %p73
        %p456 = pneg %p97
        %p457 = pneg %p94
        %p458 = pneg %p118
        %p459 = pneg %p115
        %p460 = pneg %p139
        %p461 = pneg %p136
        %p462 = pneg %p160
        %p463 = pneg %p157
        %p464 = pneg %p181
        %p465 = pneg %p178
        %p466 = pneg %p202
        %p467 = pneg %p199
        %p468 = pneg %p223
        %p469 = pneg %p220
        %p470 = pneg %p244
        %p471 = pneg %p241
        %p472 = pneg %p265
        %p473 = pneg %p262
        %p474 = pneg %p286
        %p475 = pneg %p283
        %p476 = pneg %p307
        %p477 = pneg %p304
        %p478 = pneg %p328
        %p479 = pneg %p325
        %s480 = smul.u32 4, %s32
        %p481 = scmp.lt.s32.totalorder %s480, 7
        %s482 = scalar_select %p481, %s480, 7
        %s483 = smul.addr %s482, 4
        %s484 = scalar_lea.vmem %s14, %s483
        %p485 = pneg %p354
        %p486 = pneg %p351
        %p487 = pneg %p375
        %p488 = pneg %p372
        %s489 = smul.u32 4, %s32
        %p490 = scmp.lt.s32.totalorder %s489, 7
        %s491 = scalar_select %p490, %s489, 7
        %s492 = smul.addr %s491, 4
        %s493 = scalar_lea.vmem %s14, %s492
        %s494 = smul.u32 4, %s32
        %s495 = smul.u32 %s32, 32
        %p496 = scmp.eq.s32.totalorder %s31, 0
        %p497 = scmp.eq.s32.totalorder %s32, 0
        %p498 = pnand %p496, %p497
        %p499 = pneg %p498
        // Predicated region
        $region81: #{complex_gat_forward.1} parent=79 // pred_check
          _
        $region82: #{complex_gat_forward.1} parent=79 // pred_check_branch
          %501 = sbr.rel (%p498) target = $region84
        $region83: #{complex_gat_forward.1} parent=79 // pred_region
          %v502 = vld [vmem:[%s0] sm:$0xff]
          %v503 = vld [vmem:[%s0 + $0x8] sm:$0xff]
          %v504 = vld [vmem:[%s0 + $0x10] sm:$0xff]
          %v505 = vld [vmem:[%s0 + $0x18] sm:$0xff]
          %v506 = vld [vmem:[%s0 + $0x20] sm:$0xff]
          %v507 = vld [vmem:[%s0 + $0x28] sm:$0xff]
          %v508 = vld [vmem:[%s0 + $0x30] sm:$0xff]
          %v509 = vld [vmem:[%s0 + $0x38] sm:$0xff]
          %v510 = vld [vmem:[%s1] sm:$0xff]
          %vm511 = vcmask 64512
          %v513 = vsel %vm511, %v502, 0
          %v516 = vsel %vm511, %v503, 0
          %v519 = vsel %vm511, %v504, 0
          %v522 = vsel %vm511, %v505, 0
          %v525 = vsel %vm511, %v506, 0
          %v528 = vsel %vm511, %v507, 0
          %v531 = vsel %vm511, %v508, 0
          %v534 = vsel %vm511, %v509, 0
          %536 = vmatpush.msra.mxu0 0.0
          %537 = vmatpush.msra.mxu0 0.0
          %538 = vmatpush.msra.mxu0 0.0
          %539 = vmatpush.msra.mxu0 0.0
          %540 = vmatpush.msra.mxu0 0.0
          %541 = vmatpush.msra.mxu0 0.0
          %542 = vmatpush.msra.mxu0 0.0
          %543 = vmatpush.msra.mxu0 0.0
          %544 = vmatpush.msra.mxu0 0.0
          %545 = vmatpush.msra.mxu0 0.0
          %546 = vmatpush.msra.mxu0 0.0
          %547 = vmatpush.msra.mxu0 0.0
          %548 = vmatpush.msra.mxu0 0.0
          %549 = vmatpush.msra.mxu0 0.0
          %550 = vmatpush.msra.mxu0 0.0
          %551 = vmatpush.msra.mxu0 %v510
          %552 = vmatmul.f32.gmra.mxu0 %v513
          %v553 = vpop.f32.mrf.mxu0
          %v554 = vadd.f32 0.0, %v553
          %555 = vmatmul.f32.gmra.mxu0 %v516
          %v556 = vpop.f32.mrf.mxu0
          %v557 = vadd.f32 0.0, %v556
          %558 = vmatmul.f32.gmra.mxu0 %v519
          %v559 = vpop.f32.mrf.mxu0
          %v560 = vadd.f32 0.0, %v559
          %561 = vmatmul.f32.gmra.mxu0 %v522
          %v562 = vpop.f32.mrf.mxu0
          %v563 = vadd.f32 0.0, %v562
          %564 = vmatmul.f32.gmra.mxu0 %v525
          %v565 = vpop.f32.mrf.mxu0
          %v566 = vadd.f32 0.0, %v565
          %567 = vmatmul.f32.gmra.mxu0 %v528
          %v568 = vpop.f32.mrf.mxu0
          %v569 = vadd.f32 0.0, %v568
          %570 = vmatmul.f32.gmra.mxu0 %v531
          %v571 = vpop.f32.mrf.mxu0
          %v572 = vadd.f32 0.0, %v571
          %573 = vmatmul.f32.gmra.mxu0 %v534
          %v574 = vpop.f32.mrf.mxu0
          %v575 = vadd.f32 0.0, %v574
          %576 = vdwg.mxu0
          %577 = vst [vmem:[#allocation2] sm:$0xff] %v554
          %578 = vst [vmem:[#allocation2 + $0x8] sm:$0xff] %v557
          %579 = vst [vmem:[#allocation2 + $0x10] sm:$0xff] %v560
          %580 = vst [vmem:[#allocation2 + $0x18] sm:$0xff] %v563
          %581 = vst [vmem:[#allocation2 + $0x20] sm:$0xff] %v566
          %582 = vst [vmem:[#allocation2 + $0x28] sm:$0xff] %v569
          %583 = vst [vmem:[#allocation2 + $0x30] sm:$0xff] %v572
          %584 = vst [vmem:[#allocation2 + $0x38] sm:$0xff] %v575
          %v585 = vld [vmem:[%s2] sm:$0xf]
          %586 = vmatpush.xpose.msra.mxu0 0.0
          %587 = vmatpush.xpose.msra.mxu0 0.0
          %588 = vmatpush.xpose.msra.mxu0 0.0
          %589 = vmatpush.xpose.msra.mxu0 0.0
          %590 = vmatpush.xpose.msra.mxu0 0.0
          %591 = vmatpush.xpose.msra.mxu0 0.0
          %592 = vmatpush.xpose.msra.mxu0 0.0
          %593 = vmatpush.xpose.msra.mxu0 0.0
          %594 = vmatpush.xpose.msra.mxu0 %v575
          %595 = vmatpush.xpose.msra.mxu0 %v572
          %596 = vmatpush.xpose.msra.mxu0 %v569
          %597 = vmatpush.xpose.msra.mxu0 %v566
          %598 = vmatpush.xpose.msra.mxu0 %v563
          %599 = vmatpush.xpose.msra.mxu0 %v560
          %600 = vmatpush.xpose.msra.mxu0 %v557
          %601 = vmatpush.xpose.msra.mxu0 %v554
          %602 = vmatmul.f32.gmra.mxu0 %v585
          %v603 = vpop.f32.mrf.mxu0
          %v604 = vadd.f32 0.0, %v603
          %605 = vdwg.mxu0
          %vm606 = vcmask 519168
          %607 = vst.msk [vmem:[#allocation3] sm:$0xf] %vm606, %v604
          %v608 = vld [vmem:[%s3] sm:$0xff]
          %v609 = vld [vmem:[%s3 + $0x8] sm:$0xff]
          %v610 = vld [vmem:[%s3 + $0x10] sm:$0xff]
          %v611 = vld [vmem:[%s3 + $0x18] sm:$0xff]
          %v612 = vld [vmem:[%s3 + $0x20] sm:$0xff]
          %v613 = vld [vmem:[%s3 + $0x28] sm:$0xff]
          %v614 = vld [vmem:[%s3 + $0x30] sm:$0xff]
          %v615 = vld [vmem:[%s3 + $0x38] sm:$0xff]
          %v616 = vld [vmem:[%s3 + $0x40] sm:$0xff]
          %v617 = vld [vmem:[%s3 + $0x48] sm:$0xff]
          %v618 = vld [vmem:[%s3 + $0x50] sm:$0xff]
          %v619 = vld [vmem:[%s3 + $0x58] sm:$0xff]
          %v620 = vld [vmem:[%s3 + $0x60] sm:$0xff]
          %v621 = vld [vmem:[%s3 + $0x68] sm:$0xff]
          %v622 = vld [vmem:[%s3 + $0x70] sm:$0xff]
          %v623 = vld [vmem:[%s3 + $0x78] sm:$0xff]
          %624 = vmatpush.msra.mxu0 %v623
          %625 = vmatpush.msra.mxu0 %v622
          %626 = vmatpush.msra.mxu0 %v621
          %627 = vmatpush.msra.mxu0 %v620
          %628 = vmatpush.msra.mxu0 %v619
          %629 = vmatpush.msra.mxu0 %v618
          %630 = vmatpush.msra.mxu0 %v617
          %631 = vmatpush.msra.mxu0 %v616
          %632 = vmatpush.msra.mxu0 %v615
          %633 = vmatpush.msra.mxu0 %v614
          %634 = vmatpush.msra.mxu0 %v613
          %635 = vmatpush.msra.mxu0 %v612
          %636 = vmatpush.msra.mxu0 %v611
          %637 = vmatpush.msra.mxu0 %v610
          %638 = vmatpush.msra.mxu0 %v609
          %639 = vmatpush.msra.mxu0 %v608
          %640 = vmatmul.f32.gmra.mxu0 %v554
          %v641 = vpop.f32.mrf.mxu0
          %v642 = vadd.f32 0.0, %v641
          %643 = vmatmul.f32.gmra.mxu0 %v557
          %v644 = vpop.f32.mrf.mxu0
          %v645 = vadd.f32 0.0, %v644
          %646 = vmatmul.f32.gmra.mxu0 %v560
          %v647 = vpop.f32.mrf.mxu0
          %v648 = vadd.f32 0.0, %v647
          %649 = vmatmul.f32.gmra.mxu0 %v563
          %v650 = vpop.f32.mrf.mxu0
          %v651 = vadd.f32 0.0, %v650
          %652 = vmatmul.f32.gmra.mxu0 %v566
          %v653 = vpop.f32.mrf.mxu0
          %v654 = vadd.f32 0.0, %v653
          %655 = vmatmul.f32.gmra.mxu0 %v569
          %v656 = vpop.f32.mrf.mxu0
          %v657 = vadd.f32 0.0, %v656
          %658 = vmatmul.f32.gmra.mxu0 %v572
          %v659 = vpop.f32.mrf.mxu0
          %v660 = vadd.f32 0.0, %v659
          %661 = vmatmul.f32.gmra.mxu0 %v575
          %v662 = vpop.f32.mrf.mxu0
          %v663 = vadd.f32 0.0, %v662
          %664 = vdwg.mxu0
          %vm665 = vcmask 31744
          %666 = vst.msk [vmem:[#allocation4] sm:$0xff] %vm665, %v642
          %667 = vst.msk [vmem:[#allocation4 + $0x8] sm:$0xff] %vm665, %v645
          %668 = vst.msk [vmem:[#allocation4 + $0x10] sm:$0xff] %vm665, %v648
          %669 = vst.msk [vmem:[#allocation4 + $0x18] sm:$0xff] %vm665, %v651
          %670 = vst.msk [vmem:[#allocation4 + $0x20] sm:$0xff] %vm665, %v654
          %671 = vst.msk [vmem:[#allocation4 + $0x28] sm:$0xff] %vm665, %v657
          %672 = vst.msk [vmem:[#allocation4 + $0x30] sm:$0xff] %vm665, %v660
          %673 = vst.msk [vmem:[#allocation4 + $0x38] sm:$0xff] %vm665, %v663
        $region84: #{complex_gat_forward.1} parent=79 // pred_fallthru
          _
        %p674 = scmp.eq.s32.totalorder %s31, 1
        %p675 = pnand %p674, %p497
        %p676 = pneg %p675
        // Predicated region
        $region85: #{complex_gat_forward.1} parent=79 // pred_check
          _
        $region86: #{complex_gat_forward.1} parent=79 // pred_check_branch
          %678 = sbr.rel (%p675) target = $region88
        $region87: #{complex_gat_forward.1} parent=79 // pred_region
          %v679 = vld [vmem:[#allocation5] sm:$0xff]
          %v680 = vld [vmem:[#allocation5 + $0x8] sm:$0xff]
          %v681 = vld [vmem:[#allocation5 + $0x10] sm:$0xff]
          %v682 = vld [vmem:[#allocation5 + $0x18] sm:$0xff]
          %v683 = vld [vmem:[#allocation5 + $0x20] sm:$0xff]
          %v684 = vld [vmem:[#allocation5 + $0x28] sm:$0xff]
          %v685 = vld [vmem:[#allocation5 + $0x30] sm:$0xff]
          %v686 = vld [vmem:[#allocation5 + $0x38] sm:$0xff]
          %v687 = vld [vmem:[%s5] sm:$0xff]
          %v688 = vld [vmem:[%s5 + $0x8] sm:$0xff]
          %v689 = vld [vmem:[%s5 + $0x10] sm:$0xff]
          %v690 = vld [vmem:[%s5 + $0x18] sm:$0xff]
          %vm691 = vcmask 261120
          %v693 = vsel %vm691, %v679, 0
          %v696 = vsel %vm691, %v680, 0
          %v699 = vsel %vm691, %v681, 0
          %v702 = vsel %vm691, %v682, 0
          %v705 = vsel %vm691, %v683, 0
          %v708 = vsel %vm691, %v684, 0
          %v711 = vsel %vm691, %v685, 0
          %v714 = vsel %vm691, %v686, 0
          %716 = vmatpush.msra.mxu0 0.0
          %717 = vmatpush.msra.mxu0 0.0
          %718 = vmatpush.msra.mxu0 0.0
          %719 = vmatpush.msra.mxu0 0.0
          %720 = vmatpush.msra.mxu0 0.0
          %721 = vmatpush.msra.mxu0 0.0
          %722 = vmatpush.msra.mxu0 0.0
          %723 = vmatpush.msra.mxu0 0.0
          %724 = vmatpush.msra.mxu0 0.0
          %725 = vmatpush.msra.mxu0 0.0
          %726 = vmatpush.msra.mxu0 0.0
          %727 = vmatpush.msra.mxu0 0.0
          %728 = vmatpush.msra.mxu0 %v690
          %729 = vmatpush.msra.mxu0 %v689
          %730 = vmatpush.msra.mxu0 %v688
          %731 = vmatpush.msra.mxu0 %v687
          %732 = vmatmul.f32.gmra.mxu0 %v693
          %v733 = vpop.f32.mrf.mxu0
          %v734 = vadd.f32 0.0, %v733
          %735 = vmatmul.f32.gmra.mxu0 %v696
          %v736 = vpop.f32.mrf.mxu0
          %v737 = vadd.f32 0.0, %v736
          %738 = vmatmul.f32.gmra.mxu0 %v699
          %v739 = vpop.f32.mrf.mxu0
          %v740 = vadd.f32 0.0, %v739
          %741 = vmatmul.f32.gmra.mxu0 %v702
          %v742 = vpop.f32.mrf.mxu0
          %v743 = vadd.f32 0.0, %v742
          %744 = vmatmul.f32.gmra.mxu0 %v705
          %v745 = vpop.f32.mrf.mxu0
          %v746 = vadd.f32 0.0, %v745
          %747 = vmatmul.f32.gmra.mxu0 %v708
          %v748 = vpop.f32.mrf.mxu0
          %v749 = vadd.f32 0.0, %v748
          %750 = vmatmul.f32.gmra.mxu0 %v711
          %v751 = vpop.f32.mrf.mxu0
          %v752 = vadd.f32 0.0, %v751
          %753 = vmatmul.f32.gmra.mxu0 %v714
          %v754 = vpop.f32.mrf.mxu0
          %v755 = vadd.f32 0.0, %v754
          %756 = vdwg.mxu0
          %757 = vst.msk [vmem:[#allocation6] sm:$0xff] %vm691, %v734
          %758 = vst.msk [vmem:[#allocation6 + $0x8] sm:$0xff] %vm691, %v737
          %759 = vst.msk [vmem:[#allocation6 + $0x10] sm:$0xff] %vm691, %v740
          %760 = vst.msk [vmem:[#allocation6 + $0x18] sm:$0xff] %vm691, %v743
          %761 = vst.msk [vmem:[#allocation6 + $0x20] sm:$0xff] %vm691, %v746
          %762 = vst.msk [vmem:[#allocation6 + $0x28] sm:$0xff] %vm691, %v749
          %763 = vst.msk [vmem:[#allocation6 + $0x30] sm:$0xff] %vm691, %v752
          %764 = vst.msk [vmem:[#allocation6 + $0x38] sm:$0xff] %vm691, %v755
          %v765 = vld [vmem:[%s6] sm:$0x1]
          %v767 = vsel %vm691, %v765, 0
          %v770 = vsel %vm691, %v734, 0
          %v773 = vsel %vm691, %v737, 0
          %v776 = vsel %vm691, %v740, 0
          %v779 = vsel %vm691, %v743, 0
          %v782 = vsel %vm691, %v746, 0
          %v785 = vsel %vm691, %v749, 0
          %v788 = vsel %vm691, %v752, 0
          %v791 = vsel %vm691, %v755, 0
          %793 = vmatpush.xpose.msra.mxu0 0.0
          %794 = vmatpush.xpose.msra.mxu0 0.0
          %795 = vmatpush.xpose.msra.mxu0 0.0
          %796 = vmatpush.xpose.msra.mxu0 0.0
          %797 = vmatpush.xpose.msra.mxu0 0.0
          %798 = vmatpush.xpose.msra.mxu0 0.0
          %799 = vmatpush.xpose.msra.mxu0 0.0
          %800 = vmatpush.xpose.msra.mxu0 0.0
          %801 = vmatpush.xpose.msra.mxu0 %v791
          %802 = vmatpush.xpose.msra.mxu0 %v788
          %803 = vmatpush.xpose.msra.mxu0 %v785
          %804 = vmatpush.xpose.msra.mxu0 %v782
          %805 = vmatpush.xpose.msra.mxu0 %v779
          %806 = vmatpush.xpose.msra.mxu0 %v776
          %807 = vmatpush.xpose.msra.mxu0 %v773
          %808 = vmatpush.xpose.msra.mxu0 %v770
          %809 = vmatmul.f32.gmra.mxu0 %v767
          %v810 = vpop.f32.mrf.mxu0
          %v811 = vadd.f32 0.0, %v810
          %812 = vdwg.mxu0
          %vm813 = vcmask 516096
          %814 = vst.msk [vmem:[#allocation7] sm:$0x1] %vm813, %v811
          %v815 = vld [vmem:[%s7] sm:$0xff]
          %v816 = vld [vmem:[%s7 + $0x8] sm:$0xff]
          %v817 = vld [vmem:[%s7 + $0x10] sm:$0xff]
          %v818 = vld [vmem:[%s7 + $0x18] sm:$0xff]
          %819 = vmatpush.msra.mxu0 0.0
          %820 = vmatpush.msra.mxu0 0.0
          %821 = vmatpush.msra.mxu0 0.0
          %822 = vmatpush.msra.mxu0 0.0
          %823 = vmatpush.msra.mxu0 0.0
          %824 = vmatpush.msra.mxu0 0.0
          %825 = vmatpush.msra.mxu0 0.0
          %826 = vmatpush.msra.mxu0 0.0
          %827 = vmatpush.msra.mxu0 0.0
          %828 = vmatpush.msra.mxu0 0.0
          %829 = vmatpush.msra.mxu0 0.0
          %830 = vmatpush.msra.mxu0 0.0
          %831 = vmatpush.msra.mxu0 %v818
          %832 = vmatpush.msra.mxu0 %v817
          %833 = vmatpush.msra.mxu0 %v816
          %834 = vmatpush.msra.mxu0 %v815
          %835 = vmatmul.f32.gmra.mxu0 %v770
          %v836 = vpop.f32.mrf.mxu0
          %v837 = vadd.f32 0.0, %v836
          %838 = vmatmul.f32.gmra.mxu0 %v773
          %v839 = vpop.f32.mrf.mxu0
          %v840 = vadd.f32 0.0, %v839
          %841 = vmatmul.f32.gmra.mxu0 %v776
          %v842 = vpop.f32.mrf.mxu0
          %v843 = vadd.f32 0.0, %v842
          %844 = vmatmul.f32.gmra.mxu0 %v779
          %v845 = vpop.f32.mrf.mxu0
          %v846 = vadd.f32 0.0, %v845
          %847 = vmatmul.f32.gmra.mxu0 %v782
          %v848 = vpop.f32.mrf.mxu0
          %v849 = vadd.f32 0.0, %v848
          %850 = vmatmul.f32.gmra.mxu0 %v785
          %v851 = vpop.f32.mrf.mxu0
          %v852 = vadd.f32 0.0, %v851
          %853 = vmatmul.f32.gmra.mxu0 %v788
          %v854 = vpop.f32.mrf.mxu0
          %v855 = vadd.f32 0.0, %v854
          %856 = vmatmul.f32.gmra.mxu0 %v791
          %v857 = vpop.f32.mrf.mxu0
          %v858 = vadd.f32 0.0, %v857
          %859 = vdwg.mxu0
          %vm860 = vcmask 7168
          %861 = vst.msk [vmem:[#allocation8] sm:$0xff] %vm860, %v837
          %862 = vst.msk [vmem:[#allocation8 + $0x8] sm:$0xff] %vm860, %v840
          %863 = vst.msk [vmem:[#allocation8 + $0x10] sm:$0xff] %vm860, %v843
          %864 = vst.msk [vmem:[#allocation8 + $0x18] sm:$0xff] %vm860, %v846
          %865 = vst.msk [vmem:[#allocation8 + $0x20] sm:$0xff] %vm860, %v849
          %866 = vst.msk [vmem:[#allocation8 + $0x28] sm:$0xff] %vm860, %v852
          %867 = vst.msk [vmem:[#allocation8 + $0x30] sm:$0xff] %vm860, %v855
          %868 = vst.msk [vmem:[#allocation8 + $0x38] sm:$0xff] %vm860, %v858
        $region88: #{complex_gat_forward.1} parent=79 // pred_fallthru
          _
        %v869 = vld [vmem:[%s493] sm:$0xf]
        %v870 = vld [vmem:[%s493 + $0x4] sm:$0xf]
        %v871 = vld [vmem:[%s493 + $0x8] sm:$0xf]
        %v872 = vld [vmem:[%s493 + $0xc] sm:$0xf]
        %v873 = vunpack.c.l.bf16 %v869
        %v874 = vunpack.c.l.bf16 %v870
        %v875 = vunpack.c.l.bf16 %v871
        %v876 = vunpack.c.l.bf16 %v872
        // Predicated region
        $region89: #{complex_gat_forward.1} parent=79 // pred_check
          %p877 = pneg %p496
        $region90: #{complex_gat_forward.1} parent=79 // pred_check_branch
          %879 = sbr.rel (%p877) target = $region92
        $region91: #{complex_gat_forward.1} parent=79 // pred_region
          %s880 = scalar_lea.vmem [#allocation4], %s495
          %v881 = vld [vmem:[%s880] sm:$0xff]
          %v882 = vld [vmem:[%s880 + $0x8] sm:$0xff]
          %v883 = vld [vmem:[%s880 + $0x10] sm:$0xff]
          %v884 = vld [vmem:[%s880 + $0x18] sm:$0xff]
          %v885 = vld [vmem:[#allocation3] sm:$0x1]
          %887 = vset.pattern.permute.xlu0 0
          %888 = vperm.xlu0 %887, %v881
          %v889 = vpop.permute.xlu0 %888
          %892 = vset.pattern.permute.xlu0 0
          %893 = vperm.xlu0 %892, %v882
          %v894 = vpop.permute.xlu0 %893
          %897 = vset.pattern.permute.xlu0 0
          %898 = vperm.xlu0 %897, %v883
          %v899 = vpop.permute.xlu0 %898
          %902 = vset.pattern.permute.xlu0 0
          %903 = vperm.xlu0 %902, %v884
          %v904 = vpop.permute.xlu0 %903
          %v906 = vperm.slane %v885, 0
          %v907 = vadd.f32 %v889, %v906
          %v908 = vadd.f32 %v894, %v906
          %v909 = vadd.f32 %v899, %v906
          %v910 = vadd.f32 %v904, %v906
          %vm911 = vcmp.gt.f32.partialorder %v907, 0.0
          %vm912 = vcmp.gt.f32.partialorder %v908, 0.0
          %vm913 = vcmp.gt.f32.partialorder %v909, 0.0
          %vm914 = vcmp.gt.f32.partialorder %v910, 0.0
          %v915 = vmul.f32 %v907, 0.2
          %v916 = vmul.f32 %v908, 0.2
          %v917 = vmul.f32 %v909, 0.2
          %v918 = vmul.f32 %v910, 0.2
          %v919 = vsel %vm911, %v907, %v915
          %v920 = vsel %vm912, %v908, %v916
          %v921 = vsel %vm913, %v909, %v917
          %v922 = vsel %vm914, %v910, %v918
          %vm923 = vcmask 523264
          %v924 = vsel %vm923, %v919, -inf
          %925 = vmax.xlane.f32.xlu0 %v924
          %v926 = vpop.xlane.xlu0 %925
          %v927 = vsel %vm923, %v920, -inf
          %928 = vmax.xlane.f32.xlu0 %v927
          %v929 = vpop.xlane.xlu0 %928
          %v930 = vsel %vm923, %v921, -inf
          %931 = vmax.xlane.f32.xlu0 %v930
          %v932 = vpop.xlane.xlu0 %931
          %v933 = vsel %vm923, %v922, -inf
          %934 = vmax.xlane.f32.xlu0 %v933
          %v935 = vpop.xlane.xlu0 %934
          %v936 = vsub.f32 %v919, %v926
          %v937 = vsub.f32 %v920, %v929
          %v938 = vsub.f32 %v921, %v932
          %v939 = vsub.f32 %v922, %v935
          %v940 = vmul.f32 %v936, 1.442695
          %v941 = vpow.pop %v940
          %v942 = vmul.f32 %v937, 1.442695
          %v943 = vpow.pop %v942
          %v944 = vmul.f32 %v938, 1.442695
          %v945 = vpow.pop %v944
          %v946 = vmul.f32 %v939, 1.442695
          %v947 = vpow.pop %v946
          %v948 = vmul.f32 %v941, %v873
          %v949 = vmul.f32 %v943, %v874
          %v950 = vmul.f32 %v945, %v875
          %v951 = vmul.f32 %v947, %v876
          %v952 = vsel %vm923, %v948, 0.0
          %953 = vadd.xlane.f32.xlu0 %v952
          %v954 = vpop.xlane.xlu0 %953
          %v955 = vsel %vm923, %v949, 0.0
          %956 = vadd.xlane.f32.xlu0 %v955
          %v957 = vpop.xlane.xlu0 %956
          %v958 = vsel %vm923, %v950, 0.0
          %959 = vadd.xlane.f32.xlu0 %v958
          %v960 = vpop.xlane.xlu0 %959
          %v961 = vsel %vm923, %v951, 0.0
          %962 = vadd.xlane.f32.xlu0 %v961
          %v963 = vpop.xlane.xlu0 %962
          %v964 = vmax.f32 %v954, 1e-30
          %v965 = vmax.f32 %v957, 1e-30
          %v966 = vmax.f32 %v960, 1e-30
          %v967 = vmax.f32 %v963, 1e-30
          %v968 = vrcp.pop %v964
          %v969 = vmul.f32 %v964, %v968
          %v970 = vsub.f32 1.0, %v969
          %v971 = vmul.f32 %v968, %v970
          %v972 = vadd.f32 %v968, %v971
          %vm973 = vweird.f32 %v964
          %vm974 = vweird.f32 %v968
          %vm975 = vmor %vm973, %vm974
          %v976 = vsel %vm975, %v968, %v972
          %v977 = vand.u32 2147483647, %v964
          %vm978 = vcmp.eq.f32.partialorder %v977, 8.507059e+37
          %v979 = vand.u32 %v964, 2147483648
          %v980 = vor.u32 1.1754944e-38, %v979
          %v981 = vsel %vm978, %v980, %v976
          %v982 = vmul.f32 %v948, %v981
          %v983 = vrcp.pop %v965
          %v984 = vmul.f32 %v965, %v983
          %v985 = vsub.f32 1.0, %v984
          %v986 = vmul.f32 %v983, %v985
          %v987 = vadd.f32 %v983, %v986
          %vm988 = vweird.f32 %v965
          %vm989 = vweird.f32 %v983
          %vm990 = vmor %vm988, %vm989
          %v991 = vsel %vm990, %v983, %v987
          %v992 = vand.u32 2147483647, %v965
          %vm993 = vcmp.eq.f32.partialorder %v992, 8.507059e+37
          %v994 = vand.u32 %v965, 2147483648
          %v995 = vor.u32 1.1754944e-38, %v994
          %v996 = vsel %vm993, %v995, %v991
          %v997 = vmul.f32 %v949, %v996
          %v998 = vrcp.pop %v966
          %v999 = vmul.f32 %v966, %v998
          %v1000 = vsub.f32 1.0, %v999
          %v1001 = vmul.f32 %v998, %v1000
          %v1002 = vadd.f32 %v998, %v1001
          %vm1003 = vweird.f32 %v966
          %vm1004 = vweird.f32 %v998
          %vm1005 = vmor %vm1003, %vm1004
          %v1006 = vsel %vm1005, %v998, %v1002
          %v1007 = vand.u32 2147483647, %v966
          %vm1008 = vcmp.eq.f32.partialorder %v1007, 8.507059e+37
          %v1009 = vand.u32 %v966, 2147483648
          %v1010 = vor.u32 1.1754944e-38, %v1009
          %v1011 = vsel %vm1008, %v1010, %v1006
          %v1012 = vmul.f32 %v950, %v1011
          %v1013 = vrcp.pop %v967
          %v1014 = vmul.f32 %v967, %v1013
          %v1015 = vsub.f32 1.0, %v1014
          %v1016 = vmul.f32 %v1013, %v1015
          %v1017 = vadd.f32 %v1013, %v1016
          %vm1018 = vweird.f32 %v967
          %vm1019 = vweird.f32 %v1013
          %vm1020 = vmor %vm1018, %vm1019
          %v1021 = vsel %vm1020, %v1013, %v1017
          %v1022 = vand.u32 2147483647, %v967
          %vm1023 = vcmp.eq.f32.partialorder %v1022, 8.507059e+37
          %v1024 = vand.u32 %v967, 2147483648
          %v1025 = vor.u32 1.1754944e-38, %v1024
          %v1026 = vsel %vm1023, %v1025, %v1021
          %v1027 = vmul.f32 %v951, %v1026
          %v1028 = vld [vmem:[#allocation2] sm:$0xff]
          %v1029 = vld [vmem:[#allocation2 + $0x8] sm:$0xff]
          %v1030 = vld [vmem:[#allocation2 + $0x10] sm:$0xff]
          %v1031 = vld [vmem:[#allocation2 + $0x18] sm:$0xff]
          %v1032 = vld [vmem:[#allocation2 + $0x20] sm:$0xff]
          %v1033 = vld [vmem:[#allocation2 + $0x28] sm:$0xff]
          %v1034 = vld [vmem:[#allocation2 + $0x30] sm:$0xff]
          %v1035 = vld [vmem:[#allocation2 + $0x38] sm:$0xff]
          %v1036 = vld [vmem:[#allocation3 + $0x1] sm:$0x1]
          %1037 = vset.pattern.permute.xlu0 1
          %1038 = vperm.xlu0 %1037, %v881
          %v1039 = vpop.permute.xlu0 %1038
          %1041 = vset.pattern.permute.xlu0 1
          %1042 = vperm.xlu0 %1041, %v882
          %v1043 = vpop.permute.xlu0 %1042
          %1045 = vset.pattern.permute.xlu0 1
          %1046 = vperm.xlu0 %1045, %v883
          %v1047 = vpop.permute.xlu0 %1046
          %1049 = vset.pattern.permute.xlu0 1
          %1050 = vperm.xlu0 %1049, %v884
          %v1051 = vpop.permute.xlu0 %1050
          %v1053 = vperm.slane %v1036, 0
          %v1054 = vadd.f32 %v1039, %v1053
          %v1055 = vadd.f32 %v1043, %v1053
          %v1056 = vadd.f32 %v1047, %v1053
          %v1057 = vadd.f32 %v1051, %v1053
          %vm1058 = vcmp.gt.f32.partialorder %v1054, 0.0
          %vm1059 = vcmp.gt.f32.partialorder %v1055, 0.0
          %vm1060 = vcmp.gt.f32.partialorder %v1056, 0.0
          %vm1061 = vcmp.gt.f32.partialorder %v1057, 0.0
          %v1062 = vmul.f32 %v1054, 0.2
          %v1063 = vmul.f32 %v1055, 0.2
          %v1064 = vmul.f32 %v1056, 0.2
          %v1065 = vmul.f32 %v1057, 0.2
          %v1066 = vsel %vm1058, %v1054, %v1062
          %v1067 = vsel %vm1059, %v1055, %v1063
          %v1068 = vsel %vm1060, %v1056, %v1064
          %v1069 = vsel %vm1061, %v1057, %v1065
          %v1070 = vsel %vm923, %v1066, -inf
          %1071 = vmax.xlane.f32.xlu0 %v1070
          %v1072 = vpop.xlane.xlu0 %1071
          %v1073 = vsel %vm923, %v1067, -inf
          %1074 = vmax.xlane.f32.xlu0 %v1073
          %v1075 = vpop.xlane.xlu0 %1074
          %v1076 = vsel %vm923, %v1068, -inf
          %1077 = vmax.xlane.f32.xlu0 %v1076
          %v1078 = vpop.xlane.xlu0 %1077
          %v1079 = vsel %vm923, %v1069, -inf
          %1080 = vmax.xlane.f32.xlu0 %v1079
          %v1081 = vpop.xlane.xlu0 %1080
          %v1082 = vsub.f32 %v1066, %v1072
          %v1083 = vsub.f32 %v1067, %v1075
          %v1084 = vsub.f32 %v1068, %v1078
          %v1085 = vsub.f32 %v1069, %v1081
          %v1086 = vmul.f32 %v1082, 1.442695
          %v1087 = vpow.pop %v1086
          %v1088 = vmul.f32 %v1083, 1.442695
          %v1089 = vpow.pop %v1088
          %v1090 = vmul.f32 %v1084, 1.442695
          %v1091 = vpow.pop %v1090
          %v1092 = vmul.f32 %v1085, 1.442695
          %v1093 = vpow.pop %v1092
          %v1094 = vmul.f32 %v1087, %v873
          %v1095 = vmul.f32 %v1089, %v874
          %v1096 = vmul.f32 %v1091, %v875
          %v1097 = vmul.f32 %v1093, %v876
          %v1098 = vsel %vm923, %v1094, 0.0
          %1099 = vadd.xlane.f32.xlu0 %v1098
          %v1100 = vpop.xlane.xlu0 %1099
          %v1101 = vsel %vm923, %v1095, 0.0
          %1102 = vadd.xlane.f32.xlu0 %v1101
          %v1103 = vpop.xlane.xlu0 %1102
          %v1104 = vsel %vm923, %v1096, 0.0
          %1105 = vadd.xlane.f32.xlu0 %v1104
          %v1106 = vpop.xlane.xlu0 %1105
          %v1107 = vsel %vm923, %v1097, 0.0
          %1108 = vadd.xlane.f32.xlu0 %v1107
          %v1109 = vpop.xlane.xlu0 %1108
          %v1110 = vmax.f32 %v1100, 1e-30
          %v1111 = vmax.f32 %v1103, 1e-30
          %v1112 = vmax.f32 %v1106, 1e-30
          %v1113 = vmax.f32 %v1109, 1e-30
          %v1114 = vrcp.pop %v1110
          %v1115 = vmul.f32 %v1110, %v1114
          %v1116 = vsub.f32 1.0, %v1115
          %v1117 = vmul.f32 %v1114, %v1116
          %v1118 = vadd.f32 %v1114, %v1117
          %vm1119 = vweird.f32 %v1110
          %vm1120 = vweird.f32 %v1114
          %vm1121 = vmor %vm1119, %vm1120
          %v1122 = vsel %vm1121, %v1114, %v1118
          %v1123 = vand.u32 2147483647, %v1110
          %vm1124 = vcmp.eq.f32.partialorder %v1123, 8.507059e+37
          %v1125 = vand.u32 %v1110, 2147483648
          %v1126 = vor.u32 1.1754944e-38, %v1125
          %v1127 = vsel %vm1124, %v1126, %v1122
          %v1128 = vmul.f32 %v1094, %v1127
          %v1129 = vrcp.pop %v1111
          %v1130 = vmul.f32 %v1111, %v1129
          %v1131 = vsub.f32 1.0, %v1130
          %v1132 = vmul.f32 %v1129, %v1131
          %v1133 = vadd.f32 %v1129, %v1132
          %vm1134 = vweird.f32 %v1111
          %vm1135 = vweird.f32 %v1129
          %vm1136 = vmor %vm1134, %vm1135
          %v1137 = vsel %vm1136, %v1129, %v1133
          %v1138 = vand.u32 2147483647, %v1111
          %vm1139 = vcmp.eq.f32.partialorder %v1138, 8.507059e+37
          %v1140 = vand.u32 %v1111, 2147483648
          %v1141 = vor.u32 1.1754944e-38, %v1140
          %v1142 = vsel %vm1139, %v1141, %v1137
          %v1143 = vmul.f32 %v1095, %v1142
          %v1144 = vrcp.pop %v1112
          %v1145 = vmul.f32 %v1112, %v1144
          %v1146 = vsub.f32 1.0, %v1145
          %v1147 = vmul.f32 %v1144, %v1146
          %v1148 = vadd.f32 %v1144, %v1147
          %vm1149 = vweird.f32 %v1112
          %vm1150 = vweird.f32 %v1144
          %vm1151 = vmor %vm1149, %vm1150
          %v1152 = vsel %vm1151, %v1144, %v1148
          %v1153 = vand.u32 2147483647, %v1112
          %vm1154 = vcmp.eq.f32.partialorder %v1153, 8.507059e+37
          %v1155 = vand.u32 %v1112, 2147483648
          %v1156 = vor.u32 1.1754944e-38, %v1155
          %v1157 = vsel %vm1154, %v1156, %v1152
          %v1158 = vmul.f32 %v1096, %v1157
          %v1159 = vrcp.pop %v1113
          %v1160 = vmul.f32 %v1113, %v1159
          %v1161 = vsub.f32 1.0, %v1160
          %v1162 = vmul.f32 %v1159, %v1161
          %v1163 = vadd.f32 %v1159, %v1162
          %vm1164 = vweird.f32 %v1113
          %vm1165 = vweird.f32 %v1159
          %vm1166 = vmor %vm1164, %vm1165
          %v1167 = vsel %vm1166, %v1159, %v1163
          %v1168 = vand.u32 2147483647, %v1113
          %vm1169 = vcmp.eq.f32.partialorder %v1168, 8.507059e+37
          %v1170 = vand.u32 %v1113, 2147483648
          %v1171 = vor.u32 1.1754944e-38, %v1170
          %v1172 = vsel %vm1169, %v1171, %v1167
          %v1173 = vmul.f32 %v1097, %v1172
          %1182 = vrot.lane.b32.xlu0 %v1028, 96
          %v1183 = vpop.permute.xlu0 %1182
          %1184 = vrot.lane.b32.xlu0 %v1029, 96
          %v1185 = vpop.permute.xlu0 %1184
          %1186 = vrot.lane.b32.xlu0 %v1030, 96
          %v1187 = vpop.permute.xlu0 %1186
          %1188 = vrot.lane.b32.xlu0 %v1031, 96
          %v1189 = vpop.permute.xlu0 %1188
          %1190 = vrot.lane.b32.xlu0 %v1032, 96
          %v1191 = vpop.permute.xlu0 %1190
          %1192 = vrot.lane.b32.xlu0 %v1033, 96
          %v1193 = vpop.permute.xlu0 %1192
          %1194 = vrot.lane.b32.xlu0 %v1034, 96
          %v1195 = vpop.permute.xlu0 %1194
          %1196 = vrot.lane.b32.xlu0 %v1035, 96
          %v1197 = vpop.permute.xlu0 %1196
          %v1207 = vsel %vm923, %v1128, 0
          %v1210 = vsel %vm923, %v1143, 0
          %v1213 = vsel %vm923, %v1158, 0
          %v1216 = vsel %vm923, %v1173, 0
          %1218 = vmatpush.msra.mxu0 0.0
          %1219 = vmatpush.msra.mxu0 0.0
          %1220 = vmatpush.msra.mxu0 0.0
          %1221 = vmatpush.msra.mxu0 0.0
          %1222 = vmatpush.msra.mxu0 0.0
          %1223 = vmatpush.msra.mxu0 0.0
          %1224 = vmatpush.msra.mxu0 0.0
          %1225 = vmatpush.msra.mxu0 0.0
          %1226 = vmatpush.msra.mxu0 %v1197
          %1227 = vmatpush.msra.mxu0 %v1195
          %1228 = vmatpush.msra.mxu0 %v1193
          %1229 = vmatpush.msra.mxu0 %v1191
          %1230 = vmatpush.msra.mxu0 %v1189
          %1231 = vmatpush.msra.mxu0 %v1187
          %1232 = vmatpush.msra.mxu0 %v1185
          %1233 = vmatpush.msra.mxu0 %v1183
          %1234 = vmatmul.f32.gmra.mxu0 %v1207
          %v1235 = vpop.f32.mrf.mxu0
          %v1236 = vadd.f32 0.0, %v1235
          %1237 = vmatmul.f32.gmra.mxu0 %v1210
          %v1238 = vpop.f32.mrf.mxu0
          %v1239 = vadd.f32 0.0, %v1238
          %1240 = vmatmul.f32.gmra.mxu0 %v1213
          %v1241 = vpop.f32.mrf.mxu0
          %v1242 = vadd.f32 0.0, %v1241
          %1243 = vmatmul.f32.gmra.mxu0 %v1216
          %v1244 = vpop.f32.mrf.mxu0
          %v1245 = vadd.f32 0.0, %v1244
          %1246 = vdwg.mxu0
          %v1248 = vsel %vm923, %v982, 0
          %v1251 = vsel %vm923, %v997, 0
          %v1254 = vsel %vm923, %v1012, 0
          %v1257 = vsel %vm923, %v1027, 0
          %1259 = vmatpush.msra.mxu0 0.0
          %1260 = vmatpush.msra.mxu0 0.0
          %1261 = vmatpush.msra.mxu0 0.0
          %1262 = vmatpush.msra.mxu0 0.0
          %1263 = vmatpush.msra.mxu0 0.0
          %1264 = vmatpush.msra.mxu0 0.0
          %1265 = vmatpush.msra.mxu0 0.0
          %1266 = vmatpush.msra.mxu0 0.0
          %1267 = vmatpush.msra.mxu0 %v1035
          %1268 = vmatpush.msra.mxu0 %v1034
          %1269 = vmatpush.msra.mxu0 %v1033
          %1270 = vmatpush.msra.mxu0 %v1032
          %1271 = vmatpush.msra.mxu0 %v1031
          %1272 = vmatpush.msra.mxu0 %v1030
          %1273 = vmatpush.msra.mxu0 %v1029
          %1274 = vmatpush.msra.mxu0 %v1028
          %1275 = vmatmul.f32.gmra.mxu0 %v1248
          %v1276 = vpop.f32.mrf.mxu0
          %v1277 = vadd.f32 %v1236, %v1276
          %1278 = vmatmul.f32.gmra.mxu0 %v1251
          %v1279 = vpop.f32.mrf.mxu0
          %v1280 = vadd.f32 %v1239, %v1279
          %1281 = vmatmul.f32.gmra.mxu0 %v1254
          %v1282 = vpop.f32.mrf.mxu0
          %v1283 = vadd.f32 %v1242, %v1282
          %1284 = vmatmul.f32.gmra.mxu0 %v1257
          %v1285 = vpop.f32.mrf.mxu0
          %v1286 = vadd.f32 %v1245, %v1285
          %1287 = vdwg.mxu0
          %v1288 = vld [vmem:[#allocation3 + $0x2] sm:$0x1]
          %1289 = vset.pattern.permute.xlu0 2
          %1290 = vperm.xlu0 %1289, %v881
          %v1291 = vpop.permute.xlu0 %1290
          %1293 = vset.pattern.permute.xlu0 2
          %1294 = vperm.xlu0 %1293, %v882
          %v1295 = vpop.permute.xlu0 %1294
          %1297 = vset.pattern.permute.xlu0 2
          %1298 = vperm.xlu0 %1297, %v883
          %v1299 = vpop.permute.xlu0 %1298
          %1301 = vset.pattern.permute.xlu0 2
          %1302 = vperm.xlu0 %1301, %v884
          %v1303 = vpop.permute.xlu0 %1302
          %v1305 = vperm.slane %v1288, 0
          %v1306 = vadd.f32 %v1291, %v1305
          %v1307 = vadd.f32 %v1295, %v1305
          %v1308 = vadd.f32 %v1299, %v1305
          %v1309 = vadd.f32 %v1303, %v1305
          %vm1310 = vcmp.gt.f32.partialorder %v1306, 0.0
          %vm1311 = vcmp.gt.f32.partialorder %v1307, 0.0
          %vm1312 = vcmp.gt.f32.partialorder %v1308, 0.0
          %vm1313 = vcmp.gt.f32.partialorder %v1309, 0.0
          %v1314 = vmul.f32 %v1306, 0.2
          %v1315 = vmul.f32 %v1307, 0.2
          %v1316 = vmul.f32 %v1308, 0.2
          %v1317 = vmul.f32 %v1309, 0.2
          %v1318 = vsel %vm1310, %v1306, %v1314
          %v1319 = vsel %vm1311, %v1307, %v1315
          %v1320 = vsel %vm1312, %v1308, %v1316
          %v1321 = vsel %vm1313, %v1309, %v1317
          %v1322 = vsel %vm923, %v1318, -inf
          %1323 = vmax.xlane.f32.xlu0 %v1322
          %v1324 = vpop.xlane.xlu0 %1323
          %v1325 = vsel %vm923, %v1319, -inf
          %1326 = vmax.xlane.f32.xlu0 %v1325
          %v1327 = vpop.xlane.xlu0 %1326
          %v1328 = vsel %vm923, %v1320, -inf
          %1329 = vmax.xlane.f32.xlu0 %v1328
          %v1330 = vpop.xlane.xlu0 %1329
          %v1331 = vsel %vm923, %v1321, -inf
          %1332 = vmax.xlane.f32.xlu0 %v1331
          %v1333 = vpop.xlane.xlu0 %1332
          %v1334 = vsub.f32 %v1318, %v1324
          %v1335 = vsub.f32 %v1319, %v1327
          %v1336 = vsub.f32 %v1320, %v1330
          %v1337 = vsub.f32 %v1321, %v1333
          %v1338 = vmul.f32 %v1334, 1.442695
          %v1339 = vpow.pop %v1338
          %v1340 = vmul.f32 %v1335, 1.442695
          %v1341 = vpow.pop %v1340
          %v1342 = vmul.f32 %v1336, 1.442695
          %v1343 = vpow.pop %v1342
          %v1344 = vmul.f32 %v1337, 1.442695
          %v1345 = vpow.pop %v1344
          %v1346 = vmul.f32 %v1339, %v873
          %v1347 = vmul.f32 %v1341, %v874
          %v1348 = vmul.f32 %v1343, %v875
          %v1349 = vmul.f32 %v1345, %v876
          %v1350 = vsel %vm923, %v1346, 0.0
          %1351 = vadd.xlane.f32.xlu0 %v1350
          %v1352 = vpop.xlane.xlu0 %1351
          %v1353 = vsel %vm923, %v1347, 0.0
          %1354 = vadd.xlane.f32.xlu0 %v1353
          %v1355 = vpop.xlane.xlu0 %1354
          %v1356 = vsel %vm923, %v1348, 0.0
          %1357 = vadd.xlane.f32.xlu0 %v1356
          %v1358 = vpop.xlane.xlu0 %1357
          %v1359 = vsel %vm923, %v1349, 0.0
          %1360 = vadd.xlane.f32.xlu0 %v1359
          %v1361 = vpop.xlane.xlu0 %1360
          %v1362 = vmax.f32 %v1352, 1e-30
          %v1363 = vmax.f32 %v1355, 1e-30
          %v1364 = vmax.f32 %v1358, 1e-30
          %v1365 = vmax.f32 %v1361, 1e-30
          %v1366 = vrcp.pop %v1362
          %v1367 = vmul.f32 %v1362, %v1366
          %v1368 = vsub.f32 1.0, %v1367
          %v1369 = vmul.f32 %v1366, %v1368
          %v1370 = vadd.f32 %v1366, %v1369
          %vm1371 = vweird.f32 %v1362
          %vm1372 = vweird.f32 %v1366
          %vm1373 = vmor %vm1371, %vm1372
          %v1374 = vsel %vm1373, %v1366, %v1370
          %v1375 = vand.u32 2147483647, %v1362
          %vm1376 = vcmp.eq.f32.partialorder %v1375, 8.507059e+37
          %v1377 = vand.u32 %v1362, 2147483648
          %v1378 = vor.u32 1.1754944e-38, %v1377
          %v1379 = vsel %vm1376, %v1378, %v1374
          %v1380 = vmul.f32 %v1346, %v1379
          %v1381 = vrcp.pop %v1363
          %v1382 = vmul.f32 %v1363, %v1381
          %v1383 = vsub.f32 1.0, %v1382
          %v1384 = vmul.f32 %v1381, %v1383
          %v1385 = vadd.f32 %v1381, %v1384
          %vm1386 = vweird.f32 %v1363
          %vm1387 = vweird.f32 %v1381
          %vm1388 = vmor %vm1386, %vm1387
          %v1389 = vsel %vm1388, %v1381, %v1385
          %v1390 = vand.u32 2147483647, %v1363
          %vm1391 = vcmp.eq.f32.partialorder %v1390, 8.507059e+37
          %v1392 = vand.u32 %v1363, 2147483648
          %v1393 = vor.u32 1.1754944e-38, %v1392
          %v1394 = vsel %vm1391, %v1393, %v1389
          %v1395 = vmul.f32 %v1347, %v1394
          %v1396 = vrcp.pop %v1364
          %v1397 = vmul.f32 %v1364, %v1396
          %v1398 = vsub.f32 1.0, %v1397
          %v1399 = vmul.f32 %v1396, %v1398
          %v1400 = vadd.f32 %v1396, %v1399
          %vm1401 = vweird.f32 %v1364
          %vm1402 = vweird.f32 %v1396
          %vm1403 = vmor %vm1401, %vm1402
          %v1404 = vsel %vm1403, %v1396, %v1400
          %v1405 = vand.u32 2147483647, %v1364
          %vm1406 = vcmp.eq.f32.partialorder %v1405, 8.507059e+37
          %v1407 = vand.u32 %v1364, 2147483648
          %v1408 = vor.u32 1.1754944e-38, %v1407
          %v1409 = vsel %vm1406, %v1408, %v1404
          %v1410 = vmul.f32 %v1348, %v1409
          %v1411 = vrcp.pop %v1365
          %v1412 = vmul.f32 %v1365, %v1411
          %v1413 = vsub.f32 1.0, %v1412
          %v1414 = vmul.f32 %v1411, %v1413
          %v1415 = vadd.f32 %v1411, %v1414
          %vm1416 = vweird.f32 %v1365
          %vm1417 = vweird.f32 %v1411
          %vm1418 = vmor %vm1416, %vm1417
          %v1419 = vsel %vm1418, %v1411, %v1415
          %v1420 = vand.u32 2147483647, %v1365
          %vm1421 = vcmp.eq.f32.partialorder %v1420, 8.507059e+37
          %v1422 = vand.u32 %v1365, 2147483648
          %v1423 = vor.u32 1.1754944e-38, %v1422
          %v1424 = vsel %vm1421, %v1423, %v1419
          %v1425 = vmul.f32 %v1349, %v1424
          %1426 = vrot.lane.b32.xlu0 %v1028, 64
          %v1427 = vpop.permute.xlu0 %1426
          %1428 = vrot.lane.b32.xlu0 %v1029, 64
          %v1429 = vpop.permute.xlu0 %1428
          %1430 = vrot.lane.b32.xlu0 %v1030, 64
          %v1431 = vpop.permute.xlu0 %1430
          %1432 = vrot.lane.b32.xlu0 %v1031, 64
          %v1433 = vpop.permute.xlu0 %1432
          %1434 = vrot.lane.b32.xlu0 %v1032, 64
          %v1435 = vpop.permute.xlu0 %1434
          %1436 = vrot.lane.b32.xlu0 %v1033, 64
          %v1437 = vpop.permute.xlu0 %1436
          %1438 = vrot.lane.b32.xlu0 %v1034, 64
          %v1439 = vpop.permute.xlu0 %1438
          %1440 = vrot.lane.b32.xlu0 %v1035, 64
          %v1441 = vpop.permute.xlu0 %1440
          %v1451 = vsel %vm923, %v1380, 0
          %v1454 = vsel %vm923, %v1395, 0
          %v1457 = vsel %vm923, %v1410, 0
          %v1460 = vsel %vm923, %v1425, 0
          %1462 = vmatpush.msra.mxu0 0.0
          %1463 = vmatpush.msra.mxu0 0.0
          %1464 = vmatpush.msra.mxu0 0.0
          %1465 = vmatpush.msra.mxu0 0.0
          %1466 = vmatpush.msra.mxu0 0.0
          %1467 = vmatpush.msra.mxu0 0.0
          %1468 = vmatpush.msra.mxu0 0.0
          %1469 = vmatpush.msra.mxu0 0.0
          %1470 = vmatpush.msra.mxu0 %v1441
          %1471 = vmatpush.msra.mxu0 %v1439
          %1472 = vmatpush.msra.mxu0 %v1437
          %1473 = vmatpush.msra.mxu0 %v1435
          %1474 = vmatpush.msra.mxu0 %v1433
          %1475 = vmatpush.msra.mxu0 %v1431
          %1476 = vmatpush.msra.mxu0 %v1429
          %1477 = vmatpush.msra.mxu0 %v1427
          %1478 = vmatmul.f32.gmra.mxu0 %v1451
          %v1479 = vpop.f32.mrf.mxu0
          %v1480 = vadd.f32 0.0, %v1479
          %1481 = vmatmul.f32.gmra.mxu0 %v1454
          %v1482 = vpop.f32.mrf.mxu0
          %v1483 = vadd.f32 0.0, %v1482
          %1484 = vmatmul.f32.gmra.mxu0 %v1457
          %v1485 = vpop.f32.mrf.mxu0
          %v1486 = vadd.f32 0.0, %v1485
          %1487 = vmatmul.f32.gmra.mxu0 %v1460
          %v1488 = vpop.f32.mrf.mxu0
          %v1489 = vadd.f32 0.0, %v1488
          %1490 = vdwg.mxu0
          %v1491 = vadd.f32 %v1277, %v1480
          %v1492 = vadd.f32 %v1280, %v1483
          %v1493 = vadd.f32 %v1283, %v1486
          %v1494 = vadd.f32 %v1286, %v1489
          %v1495 = vld [vmem:[#allocation3 + $0x3] sm:$0x1]
          %1496 = vset.pattern.permute.xlu0 3
          %1497 = vperm.xlu0 %1496, %v881
          %v1498 = vpop.permute.xlu0 %1497
          %1500 = vset.pattern.permute.xlu0 3
          %1501 = vperm.xlu0 %1500, %v882
          %v1502 = vpop.permute.xlu0 %1501
          %1504 = vset.pattern.permute.xlu0 3
          %1505 = vperm.xlu0 %1504, %v883
          %v1506 = vpop.permute.xlu0 %1505
          %1508 = vset.pattern.permute.xlu0 3
          %1509 = vperm.xlu0 %1508, %v884
          %v1510 = vpop.permute.xlu0 %1509
          %v1512 = vperm.slane %v1495, 0
          %v1513 = vadd.f32 %v1498, %v1512
          %v1514 = vadd.f32 %v1502, %v1512
          %v1515 = vadd.f32 %v1506, %v1512
          %v1516 = vadd.f32 %v1510, %v1512
          %vm1517 = vcmp.gt.f32.partialorder %v1513, 0.0
          %vm1518 = vcmp.gt.f32.partialorder %v1514, 0.0
          %vm1519 = vcmp.gt.f32.partialorder %v1515, 0.0
          %vm1520 = vcmp.gt.f32.partialorder %v1516, 0.0
          %v1521 = vmul.f32 %v1513, 0.2
          %v1522 = vmul.f32 %v1514, 0.2
          %v1523 = vmul.f32 %v1515, 0.2
          %v1524 = vmul.f32 %v1516, 0.2
          %v1525 = vsel %vm1517, %v1513, %v1521
          %v1526 = vsel %vm1518, %v1514, %v1522
          %v1527 = vsel %vm1519, %v1515, %v1523
          %v1528 = vsel %vm1520, %v1516, %v1524
          %v1529 = vsel %vm923, %v1525, -inf
          %1530 = vmax.xlane.f32.xlu0 %v1529
          %v1531 = vpop.xlane.xlu0 %1530
          %v1532 = vsel %vm923, %v1526, -inf
          %1533 = vmax.xlane.f32.xlu0 %v1532
          %v1534 = vpop.xlane.xlu0 %1533
          %v1535 = vsel %vm923, %v1527, -inf
          %1536 = vmax.xlane.f32.xlu0 %v1535
          %v1537 = vpop.xlane.xlu0 %1536
          %v1538 = vsel %vm923, %v1528, -inf
          %1539 = vmax.xlane.f32.xlu0 %v1538
          %v1540 = vpop.xlane.xlu0 %1539
          %v1541 = vsub.f32 %v1525, %v1531
          %v1542 = vsub.f32 %v1526, %v1534
          %v1543 = vsub.f32 %v1527, %v1537
          %v1544 = vsub.f32 %v1528, %v1540
          %v1545 = vmul.f32 %v1541, 1.442695
          %v1546 = vpow.pop %v1545
          %v1547 = vmul.f32 %v1542, 1.442695
          %v1548 = vpow.pop %v1547
          %v1549 = vmul.f32 %v1543, 1.442695
          %v1550 = vpow.pop %v1549
          %v1551 = vmul.f32 %v1544, 1.442695
          %v1552 = vpow.pop %v1551
          %v1553 = vmul.f32 %v1546, %v873
          %v1554 = vmul.f32 %v1548, %v874
          %v1555 = vmul.f32 %v1550, %v875
          %v1556 = vmul.f32 %v1552, %v876
          %v1557 = vsel %vm923, %v1553, 0.0
          %1558 = vadd.xlane.f32.xlu0 %v1557
          %v1559 = vpop.xlane.xlu0 %1558
          %v1560 = vsel %vm923, %v1554, 0.0
          %1561 = vadd.xlane.f32.xlu0 %v1560
          %v1562 = vpop.xlane.xlu0 %1561
          %v1563 = vsel %vm923, %v1555, 0.0
          %1564 = vadd.xlane.f32.xlu0 %v1563
          %v1565 = vpop.xlane.xlu0 %1564
          %v1566 = vsel %vm923, %v1556, 0.0
          %1567 = vadd.xlane.f32.xlu0 %v1566
          %v1568 = vpop.xlane.xlu0 %1567
          %v1569 = vmax.f32 %v1559, 1e-30
          %v1570 = vmax.f32 %v1562, 1e-30
          %v1571 = vmax.f32 %v1565, 1e-30
          %v1572 = vmax.f32 %v1568, 1e-30
          %v1573 = vrcp.pop %v1569
          %v1574 = vmul.f32 %v1569, %v1573
          %v1575 = vsub.f32 1.0, %v1574
          %v1576 = vmul.f32 %v1573, %v1575
          %v1577 = vadd.f32 %v1573, %v1576
          %vm1578 = vweird.f32 %v1569
          %vm1579 = vweird.f32 %v1573
          %vm1580 = vmor %vm1578, %vm1579
          %v1581 = vsel %vm1580, %v1573, %v1577
          %v1582 = vand.u32 2147483647, %v1569
          %vm1583 = vcmp.eq.f32.partialorder %v1582, 8.507059e+37
          %v1584 = vand.u32 %v1569, 2147483648
          %v1585 = vor.u32 1.1754944e-38, %v1584
          %v1586 = vsel %vm1583, %v1585, %v1581
          %v1587 = vmul.f32 %v1553, %v1586
          %v1588 = vrcp.pop %v1570
          %v1589 = vmul.f32 %v1570, %v1588
          %v1590 = vsub.f32 1.0, %v1589
          %v1591 = vmul.f32 %v1588, %v1590
          %v1592 = vadd.f32 %v1588, %v1591
          %vm1593 = vweird.f32 %v1570
          %vm1594 = vweird.f32 %v1588
          %vm1595 = vmor %vm1593, %vm1594
          %v1596 = vsel %vm1595, %v1588, %v1592
          %v1597 = vand.u32 2147483647, %v1570
          %vm1598 = vcmp.eq.f32.partialorder %v1597, 8.507059e+37
          %v1599 = vand.u32 %v1570, 2147483648
          %v1600 = vor.u32 1.1754944e-38, %v1599
          %v1601 = vsel %vm1598, %v1600, %v1596
          %v1602 = vmul.f32 %v1554, %v1601
          %v1603 = vrcp.pop %v1571
          %v1604 = vmul.f32 %v1571, %v1603
          %v1605 = vsub.f32 1.0, %v1604
          %v1606 = vmul.f32 %v1603, %v1605
          %v1607 = vadd.f32 %v1603, %v1606
          %vm1608 = vweird.f32 %v1571
          %vm1609 = vweird.f32 %v1603
          %vm1610 = vmor %vm1608, %vm1609
          %v1611 = vsel %vm1610, %v1603, %v1607
          %v1612 = vand.u32 2147483647, %v1571
          %vm1613 = vcmp.eq.f32.partialorder %v1612, 8.507059e+37
          %v1614 = vand.u32 %v1571, 2147483648
          %v1615 = vor.u32 1.1754944e-38, %v1614
          %v1616 = vsel %vm1613, %v1615, %v1611
          %v1617 = vmul.f32 %v1555, %v1616
          %v1618 = vrcp.pop %v1572
          %v1619 = vmul.f32 %v1572, %v1618
          %v1620 = vsub.f32 1.0, %v1619
          %v1621 = vmul.f32 %v1618, %v1620
          %v1622 = vadd.f32 %v1618, %v1621
          %vm1623 = vweird.f32 %v1572
          %vm1624 = vweird.f32 %v1618
          %vm1625 = vmor %vm1623, %vm1624
          %v1626 = vsel %vm1625, %v1618, %v1622
          %v1627 = vand.u32 2147483647, %v1572
          %vm1628 = vcmp.eq.f32.partialorder %v1627, 8.507059e+37
          %v1629 = vand.u32 %v1572, 2147483648
          %v1630 = vor.u32 1.1754944e-38, %v1629
          %v1631 = vsel %vm1628, %v1630, %v1626
          %v1632 = vmul.f32 %v1556, %v1631
          %1633 = vrot.lane.b32.xlu0 %v1028, 32
          %v1634 = vpop.permute.xlu0 %1633
          %1635 = vrot.lane.b32.xlu0 %v1029, 32
          %v1636 = vpop.permute.xlu0 %1635
          %1637 = vrot.lane.b32.xlu0 %v1030, 32
          %v1638 = vpop.permute.xlu0 %1637
          %1639 = vrot.lane.b32.xlu0 %v1031, 32
          %v1640 = vpop.permute.xlu0 %1639
          %1641 = vrot.lane.b32.xlu0 %v1032, 32
          %v1642 = vpop.permute.xlu0 %1641
          %1643 = vrot.lane.b32.xlu0 %v1033, 32
          %v1644 = vpop.permute.xlu0 %1643
          %1645 = vrot.lane.b32.xlu0 %v1034, 32
          %v1646 = vpop.permute.xlu0 %1645
          %1647 = vrot.lane.b32.xlu0 %v1035, 32
          %v1648 = vpop.permute.xlu0 %1647
          %v1658 = vsel %vm923, %v1587, 0
          %v1661 = vsel %vm923, %v1602, 0
          %v1664 = vsel %vm923, %v1617, 0
          %v1667 = vsel %vm923, %v1632, 0
          %1669 = vmatpush.msra.mxu0 0.0
          %1670 = vmatpush.msra.mxu0 0.0
          %1671 = vmatpush.msra.mxu0 0.0
          %1672 = vmatpush.msra.mxu0 0.0
          %1673 = vmatpush.msra.mxu0 0.0
          %1674 = vmatpush.msra.mxu0 0.0
          %1675 = vmatpush.msra.mxu0 0.0
          %1676 = vmatpush.msra.mxu0 0.0
          %1677 = vmatpush.msra.mxu0 %v1648
          %1678 = vmatpush.msra.mxu0 %v1646
          %1679 = vmatpush.msra.mxu0 %v1644
          %1680 = vmatpush.msra.mxu0 %v1642
          %1681 = vmatpush.msra.mxu0 %v1640
          %1682 = vmatpush.msra.mxu0 %v1638
          %1683 = vmatpush.msra.mxu0 %v1636
          %1684 = vmatpush.msra.mxu0 %v1634
          %1685 = vmatmul.f32.gmra.mxu0 %v1658
          %v1686 = vpop.f32.mrf.mxu0
          %v1687 = vadd.f32 0.0, %v1686
          %1688 = vmatmul.f32.gmra.mxu0 %v1661
          %v1689 = vpop.f32.mrf.mxu0
          %v1690 = vadd.f32 0.0, %v1689
          %1691 = vmatmul.f32.gmra.mxu0 %v1664
          %v1692 = vpop.f32.mrf.mxu0
          %v1693 = vadd.f32 0.0, %v1692
          %1694 = vmatmul.f32.gmra.mxu0 %v1667
          %v1695 = vpop.f32.mrf.mxu0
          %v1696 = vadd.f32 0.0, %v1695
          %1697 = vdwg.mxu0
          %v1698 = vadd.f32 %v1491, %v1687
          %v1699 = vadd.f32 %v1492, %v1690
          %v1700 = vadd.f32 %v1493, %v1693
          %v1701 = vadd.f32 %v1494, %v1696
          %v1702 = vmul.f32 %v1698, 0.25
          %v1703 = vmul.f32 %v1699, 0.25
          %v1704 = vmul.f32 %v1700, 0.25
          %v1705 = vmul.f32 %v1701, 0.25
          %v1706 = vld [vmem:[%s4] sm:$0x1]
          %v1708 = vperm.slane %v1706, 0
          %v1710 = vadd.f32 %v1702, %v1708
          %v1711 = vadd.f32 %v1703, %v1708
          %v1712 = vadd.f32 %v1704, %v1708
          %v1713 = vadd.f32 %v1705, %v1708
          %vm1714 = vcmp.gt.f32.partialorder %v1710, 0.0
          %vm1715 = vcmp.gt.f32.partialorder %v1711, 0.0
          %vm1716 = vcmp.gt.f32.partialorder %v1712, 0.0
          %vm1717 = vcmp.gt.f32.partialorder %v1713, 0.0
          %v1718 = vmul.f32 %v1710, 1.442695
          %v1719 = vpow.pop %v1718
          %v1720 = vmul.f32 %v1711, 1.442695
          %v1721 = vpow.pop %v1720
          %v1722 = vmul.f32 %v1712, 1.442695
          %v1723 = vpow.pop %v1722
          %v1724 = vmul.f32 %v1713, 1.442695
          %v1725 = vpow.pop %v1724
          %v1726 = vsub.f32 %v1719, 1.0
          %v1727 = vsub.f32 %v1721, 1.0
          %v1728 = vsub.f32 %v1723, 1.0
          %v1729 = vsub.f32 %v1725, 1.0
          %v1730 = vmul.f32 %v1726, 1.6732632
          %v1731 = vmul.f32 %v1727, 1.6732632
          %v1732 = vmul.f32 %v1728, 1.6732632
          %v1733 = vmul.f32 %v1729, 1.6732632
          %v1734 = vsel %vm1714, %v1710, %v1730
          %v1735 = vsel %vm1715, %v1711, %v1731
          %v1736 = vsel %vm1716, %v1712, %v1732
          %v1737 = vsel %vm1717, %v1713, %v1733
          %v1738 = vmul.f32 %v1734, 1.050701
          %v1739 = vmul.f32 %v1735, 1.050701
          %v1740 = vmul.f32 %v1736, 1.050701
          %v1741 = vmul.f32 %v1737, 1.050701
          %s1742 = scalar_lea.vmem [#allocation5], %s495
          %vm1743 = vcmask 261120
          %1744 = vst.msk [vmem:[%s1742] sm:$0xff] %vm1743, %v1738
          %1745 = vst.msk [vmem:[%s1742 + $0x8] sm:$0xff] %vm1743, %v1739
          %1746 = vst.msk [vmem:[%s1742 + $0x10] sm:$0xff] %vm1743, %v1740
          %1747 = vst.msk [vmem:[%s1742 + $0x18] sm:$0xff] %vm1743, %v1741
        $region92: #{complex_gat_forward.1} parent=79 // pred_fallthru
          _
        // Predicated region
        $region93: #{complex_gat_forward.1} parent=79 // pred_check
          %p1748 = pneg %p674
        $region94: #{complex_gat_forward.1} parent=79 // pred_check_branch
          %1750 = sbr.rel (%p1748) target = $region96
        $region95: #{complex_gat_forward.1} parent=79 // pred_region
          %s1751 = scalar_lea.vmem [#allocation8], %s495
          %v1752 = vld [vmem:[%s1751] sm:$0xff]
          %v1753 = vld [vmem:[%s1751 + $0x8] sm:$0xff]
          %v1754 = vld [vmem:[%s1751 + $0x10] sm:$0xff]
          %v1755 = vld [vmem:[%s1751 + $0x18] sm:$0xff]
          %v1756 = vld [vmem:[#allocation7] sm:$0x1]
          %1758 = vset.pattern.permute.xlu0 0
          %1759 = vperm.xlu0 %1758, %v1752
          %v1760 = vpop.permute.xlu0 %1759
          %1763 = vset.pattern.permute.xlu0 0
          %1764 = vperm.xlu0 %1763, %v1753
          %v1765 = vpop.permute.xlu0 %1764
          %1768 = vset.pattern.permute.xlu0 0
          %1769 = vperm.xlu0 %1768, %v1754
          %v1770 = vpop.permute.xlu0 %1769
          %1773 = vset.pattern.permute.xlu0 0
          %1774 = vperm.xlu0 %1773, %v1755
          %v1775 = vpop.permute.xlu0 %1774
          %v1778 = vperm.slane %v1756, 0
          %v1780 = vadd.f32 %v1760, %v1778
          %v1781 = vadd.f32 %v1765, %v1778
          %v1782 = vadd.f32 %v1770, %v1778
          %v1783 = vadd.f32 %v1775, %v1778
          %vm1784 = vcmp.gt.f32.partialorder %v1780, 0.0
          %vm1785 = vcmp.gt.f32.partialorder %v1781, 0.0
          %vm1786 = vcmp.gt.f32.partialorder %v1782, 0.0
          %vm1787 = vcmp.gt.f32.partialorder %v1783, 0.0
          %v1788 = vmul.f32 %v1780, 0.2
          %v1789 = vmul.f32 %v1781, 0.2
          %v1790 = vmul.f32 %v1782, 0.2
          %v1791 = vmul.f32 %v1783, 0.2
          %v1792 = vsel %vm1784, %v1780, %v1788
          %v1793 = vsel %vm1785, %v1781, %v1789
          %v1794 = vsel %vm1786, %v1782, %v1790
          %v1795 = vsel %vm1787, %v1783, %v1791
          %vm1796 = vcmask 523264
          %v1797 = vsel %vm1796, %v1792, -inf
          %1798 = vmax.xlane.f32.xlu0 %v1797
          %v1799 = vpop.xlane.xlu0 %1798
          %v1800 = vsel %vm1796, %v1793, -inf
          %1801 = vmax.xlane.f32.xlu0 %v1800
          %v1802 = vpop.xlane.xlu0 %1801
          %v1803 = vsel %vm1796, %v1794, -inf
          %1804 = vmax.xlane.f32.xlu0 %v1803
          %v1805 = vpop.xlane.xlu0 %1804
          %v1806 = vsel %vm1796, %v1795, -inf
          %1807 = vmax.xlane.f32.xlu0 %v1806
          %v1808 = vpop.xlane.xlu0 %1807
          %v1809 = vsub.f32 %v1792, %v1799
          %v1810 = vsub.f32 %v1793, %v1802
          %v1811 = vsub.f32 %v1794, %v1805
          %v1812 = vsub.f32 %v1795, %v1808
          %v1813 = vmul.f32 %v1809, 1.442695
          %v1814 = vpow.pop %v1813
          %v1815 = vmul.f32 %v1810, 1.442695
          %v1816 = vpow.pop %v1815
          %v1817 = vmul.f32 %v1811, 1.442695
          %v1818 = vpow.pop %v1817
          %v1819 = vmul.f32 %v1812, 1.442695
          %v1820 = vpow.pop %v1819
          %v1821 = vmul.f32 %v1814, %v873
          %v1822 = vmul.f32 %v1816, %v874
          %v1823 = vmul.f32 %v1818, %v875
          %v1824 = vmul.f32 %v1820, %v876
          %v1825 = vsel %vm1796, %v1821, 0.0
          %1826 = vadd.xlane.f32.xlu0 %v1825
          %v1827 = vpop.xlane.xlu0 %1826
          %v1828 = vsel %vm1796, %v1822, 0.0
          %1829 = vadd.xlane.f32.xlu0 %v1828
          %v1830 = vpop.xlane.xlu0 %1829
          %v1831 = vsel %vm1796, %v1823, 0.0
          %1832 = vadd.xlane.f32.xlu0 %v1831
          %v1833 = vpop.xlane.xlu0 %1832
          %v1834 = vsel %vm1796, %v1824, 0.0
          %1835 = vadd.xlane.f32.xlu0 %v1834
          %v1836 = vpop.xlane.xlu0 %1835
          %v1837 = vmax.f32 %v1827, 1e-30
          %v1838 = vmax.f32 %v1830, 1e-30
          %v1839 = vmax.f32 %v1833, 1e-30
          %v1840 = vmax.f32 %v1836, 1e-30
          %v1841 = vrcp.pop %v1837
          %v1842 = vmul.f32 %v1837, %v1841
          %v1843 = vsub.f32 1.0, %v1842
          %v1844 = vmul.f32 %v1841, %v1843
          %v1845 = vadd.f32 %v1841, %v1844
          %vm1846 = vweird.f32 %v1837
          %vm1847 = vweird.f32 %v1841
          %vm1848 = vmor %vm1846, %vm1847
          %v1849 = vsel %vm1848, %v1841, %v1845
          %v1850 = vand.u32 2147483647, %v1837
          %vm1851 = vcmp.eq.f32.partialorder %v1850, 8.507059e+37
          %v1852 = vand.u32 %v1837, 2147483648
          %v1853 = vor.u32 1.1754944e-38, %v1852
          %v1854 = vsel %vm1851, %v1853, %v1849
          %v1855 = vmul.f32 %v1821, %v1854
          %v1856 = vrcp.pop %v1838
          %v1857 = vmul.f32 %v1838, %v1856
          %v1858 = vsub.f32 1.0, %v1857
          %v1859 = vmul.f32 %v1856, %v1858
          %v1860 = vadd.f32 %v1856, %v1859
          %vm1861 = vweird.f32 %v1838
          %vm1862 = vweird.f32 %v1856
          %vm1863 = vmor %vm1861, %vm1862
          %v1864 = vsel %vm1863, %v1856, %v1860
          %v1865 = vand.u32 2147483647, %v1838
          %vm1866 = vcmp.eq.f32.partialorder %v1865, 8.507059e+37
          %v1867 = vand.u32 %v1838, 2147483648
          %v1868 = vor.u32 1.1754944e-38, %v1867
          %v1869 = vsel %vm1866, %v1868, %v1864
          %v1870 = vmul.f32 %v1822, %v1869
          %v1871 = vrcp.pop %v1839
          %v1872 = vmul.f32 %v1839, %v1871
          %v1873 = vsub.f32 1.0, %v1872
          %v1874 = vmul.f32 %v1871, %v1873
          %v1875 = vadd.f32 %v1871, %v1874
          %vm1876 = vweird.f32 %v1839
          %vm1877 = vweird.f32 %v1871
          %vm1878 = vmor %vm1876, %vm1877
          %v1879 = vsel %vm1878, %v1871, %v1875
          %v1880 = vand.u32 2147483647, %v1839
          %vm1881 = vcmp.eq.f32.partialorder %v1880, 8.507059e+37
          %v1882 = vand.u32 %v1839, 2147483648
          %v1883 = vor.u32 1.1754944e-38, %v1882
          %v1884 = vsel %vm1881, %v1883, %v1879
          %v1885 = vmul.f32 %v1823, %v1884
          %v1886 = vrcp.pop %v1840
          %v1887 = vmul.f32 %v1840, %v1886
          %v1888 = vsub.f32 1.0, %v1887
          %v1889 = vmul.f32 %v1886, %v1888
          %v1890 = vadd.f32 %v1886, %v1889
          %vm1891 = vweird.f32 %v1840
          %vm1892 = vweird.f32 %v1886
          %vm1893 = vmor %vm1891, %vm1892
          %v1894 = vsel %vm1893, %v1886, %v1890
          %v1895 = vand.u32 2147483647, %v1840
          %vm1896 = vcmp.eq.f32.partialorder %v1895, 8.507059e+37
          %v1897 = vand.u32 %v1840, 2147483648
          %v1898 = vor.u32 1.1754944e-38, %v1897
          %v1899 = vsel %vm1896, %v1898, %v1894
          %v1900 = vmul.f32 %v1824, %v1899
          %v1901 = vld [vmem:[#allocation6] sm:$0xff]
          %v1902 = vld [vmem:[#allocation6 + $0x8] sm:$0xff]
          %v1903 = vld [vmem:[#allocation6 + $0x10] sm:$0xff]
          %v1904 = vld [vmem:[#allocation6 + $0x18] sm:$0xff]
          %v1905 = vld [vmem:[#allocation6 + $0x20] sm:$0xff]
          %v1906 = vld [vmem:[#allocation6 + $0x28] sm:$0xff]
          %v1907 = vld [vmem:[#allocation6 + $0x30] sm:$0xff]
          %v1908 = vld [vmem:[#allocation6 + $0x38] sm:$0xff]
          %v1909 = vld [vmem:[%s8] sm:$0x1]
          %v1911 = vperm.slane %v1909, 0
          %v1914 = vsel %vm1796, %v1855, 0
          %v1917 = vsel %vm1796, %v1870, 0
          %v1920 = vsel %vm1796, %v1885, 0
          %v1923 = vsel %vm1796, %v1900, 0
          %1925 = vmatpush.msra.mxu0 0.0
          %1926 = vmatpush.msra.mxu0 0.0
          %1927 = vmatpush.msra.mxu0 0.0
          %1928 = vmatpush.msra.mxu0 0.0
          %1929 = vmatpush.msra.mxu0 0.0
          %1930 = vmatpush.msra.mxu0 0.0
          %1931 = vmatpush.msra.mxu0 0.0
          %1932 = vmatpush.msra.mxu0 0.0
          %1933 = vmatpush.msra.mxu0 %v1908
          %1934 = vmatpush.msra.mxu0 %v1907
          %1935 = vmatpush.msra.mxu0 %v1906
          %1936 = vmatpush.msra.mxu0 %v1905
          %1937 = vmatpush.msra.mxu0 %v1904
          %1938 = vmatpush.msra.mxu0 %v1903
          %1939 = vmatpush.msra.mxu0 %v1902
          %1940 = vmatpush.msra.mxu0 %v1901
          %1941 = vmatmul.f32.gmra.mxu0 %v1914
          %v1942 = vpop.f32.mrf.mxu0
          %v1943 = vadd.f32 %v1911, %v1942
          %1944 = vmatmul.f32.gmra.mxu0 %v1917
          %v1945 = vpop.f32.mrf.mxu0
          %v1946 = vadd.f32 %v1911, %v1945
          %1947 = vmatmul.f32.gmra.mxu0 %v1920
          %v1948 = vpop.f32.mrf.mxu0
          %v1949 = vadd.f32 %v1911, %v1948
          %1950 = vmatmul.f32.gmra.mxu0 %v1923
          %v1951 = vpop.f32.mrf.mxu0
          %v1952 = vadd.f32 %v1911, %v1951
          %1953 = vdwg.mxu0
          %vm1954 = vcmp.gt.f32.partialorder %v1943, 0.0
          %vm1955 = vcmp.gt.f32.partialorder %v1946, 0.0
          %vm1956 = vcmp.gt.f32.partialorder %v1949, 0.0
          %vm1957 = vcmp.gt.f32.partialorder %v1952, 0.0
          %v1958 = vmul.f32 %v1943, 1.442695
          %v1959 = vpow.pop %v1958
          %v1960 = vmul.f32 %v1946, 1.442695
          %v1961 = vpow.pop %v1960
          %v1962 = vmul.f32 %v1949, 1.442695
          %v1963 = vpow.pop %v1962
          %v1964 = vmul.f32 %v1952, 1.442695
          %v1965 = vpow.pop %v1964
          %v1966 = vsub.f32 %v1959, 1.0
          %v1967 = vsub.f32 %v1961, 1.0
          %v1968 = vsub.f32 %v1963, 1.0
          %v1969 = vsub.f32 %v1965, 1.0
          %v1970 = vmul.f32 %v1966, 1.6732632
          %v1971 = vmul.f32 %v1967, 1.6732632
          %v1972 = vmul.f32 %v1968, 1.6732632
          %v1973 = vmul.f32 %v1969, 1.6732632
          %v1974 = vsel %vm1954, %v1943, %v1970
          %v1975 = vsel %vm1955, %v1946, %v1971
          %v1976 = vsel %vm1956, %v1949, %v1972
          %v1977 = vsel %vm1957, %v1952, %v1973
          %v1978 = vmul.f32 %v1974, 1.050701
          %v1979 = vmul.f32 %v1975, 1.050701
          %v1980 = vmul.f32 %v1976, 1.050701
          %v1981 = vmul.f32 %v1977, 1.050701
          %s1982 = scalar_lea.vmem [#allocation9], %s495
          %vm1983 = vcmask 261120
          %1984 = vst.msk [vmem:[%s1982] sm:$0xff] %vm1983, %v1978
          %1985 = vst.msk [vmem:[%s1982 + $0x8] sm:$0xff] %vm1983, %v1979
          %1986 = vst.msk [vmem:[%s1982 + $0x10] sm:$0xff] %vm1983, %v1980
          %1987 = vst.msk [vmem:[%s1982 + $0x18] sm:$0xff] %vm1983, %v1981
          %p1988 = scmp.eq.s32.totalorder %s32, 1
          // Predicated region
          $region97: #{complex_gat_forward.1} parent=95 // pred_check
            %p1989 = pneg %p1988
          $region98: #{complex_gat_forward.1} parent=95 // pred_check_branch
            %1991 = sbr.rel (%p1989) target = $region100
          $region99: #{complex_gat_forward.1} parent=95 // pred_region
            %v1992 = vld [vmem:[%s13] sm:$0x3]
            %v1993 = vld [vmem:[#allocation9] sm:$0xff]
            %v1994 = vld [vmem:[#allocation9 + $0x8] sm:$0xff]
            %v1995 = vld [vmem:[#allocation9 + $0x10] sm:$0xff]
            %v1996 = vld [vmem:[#allocation9 + $0x18] sm:$0xff]
            %v1997 = vld [vmem:[#allocation9 + $0x20] sm:$0xff]
            %v1998 = vld [vmem:[#allocation9 + $0x28] sm:$0xff]
            %v1999 = vld [vmem:[#allocation9 + $0x30] sm:$0xff]
            %v2000 = vld [vmem:[#allocation9 + $0x38] sm:$0xff]
            %v2002 = vsel %vm1796, %v1992, 0
            %2004 = vmatpush.msra.mxu0 0.0
            %2005 = vmatpush.msra.mxu0 0.0
            %2006 = vmatpush.msra.mxu0 0.0
            %2007 = vmatpush.msra.mxu0 0.0
            %2008 = vmatpush.msra.mxu0 0.0
            %2009 = vmatpush.msra.mxu0 0.0
            %2010 = vmatpush.msra.mxu0 0.0
            %2011 = vmatpush.msra.mxu0 0.0
            %2012 = vmatpush.msra.mxu0 %v2000
            %2013 = vmatpush.msra.mxu0 %v1999
            %2014 = vmatpush.msra.mxu0 %v1998
            %2015 = vmatpush.msra.mxu0 %v1997
            %2016 = vmatpush.msra.mxu0 %v1996
            %2017 = vmatpush.msra.mxu0 %v1995
            %2018 = vmatpush.msra.mxu0 %v1994
            %2019 = vmatpush.msra.mxu0 %v1993
            %2020 = vmatmul.f32.gmra.mxu0 %v2002
            %v2021 = vpop.f32.mrf.mxu0
            %v2022 = vadd.f32 0.0, %v2021
            %2023 = vdwg.mxu0
            %v2024 = vld [vmem:[%s9] sm:$0xff]
            %v2025 = vld [vmem:[%s9 + $0x8] sm:$0xff]
            %v2026 = vld [vmem:[%s9 + $0x10] sm:$0xff]
            %v2027 = vld [vmem:[%s9 + $0x18] sm:$0xff]
            %v2028 = vld [vmem:[%s10] sm:$0x1]
            %v2030 = vperm.slane %v2028, 0
            %v2033 = vsel %vm1983, %v2022, 0
            %2035 = vmatpush.msra.mxu0 0.0
            %2036 = vmatpush.msra.mxu0 0.0
            %2037 = vmatpush.msra.mxu0 0.0
            %2038 = vmatpush.msra.mxu0 0.0
            %2039 = vmatpush.msra.mxu0 0.0
            %2040 = vmatpush.msra.mxu0 0.0
            %2041 = vmatpush.msra.mxu0 0.0
            %2042 = vmatpush.msra.mxu0 0.0
            %2043 = vmatpush.msra.mxu0 0.0
            %2044 = vmatpush.msra.mxu0 0.0
            %2045 = vmatpush.msra.mxu0 0.0
            %2046 = vmatpush.msra.mxu0 0.0
            %2047 = vmatpush.msra.mxu0 %v2027
            %2048 = vmatpush.msra.mxu0 %v2026
            %2049 = vmatpush.msra.mxu0 %v2025
            %2050 = vmatpush.msra.mxu0 %v2024
            %2051 = vmatmul.f32.gmra.mxu0 %v2033
            %v2052 = vpop.f32.mrf.mxu0
            %v2053 = vadd.f32 %v2030, %v2052
            %2054 = vdwg.mxu0
            %vm2055 = vcmp.gt.f32.partialorder %v2053, 0.0
            %v2056 = vmul.f32 %v2053, 1.442695
            %v2057 = vpow.pop %v2056
            %v2058 = vsub.f32 %v2057, 1.0
            %v2059 = vmul.f32 %v2058, 1.6732632
            %v2060 = vsel %vm2055, %v2053, %v2059
            %v2061 = vmul.f32 %v2060, 1.050701
            %v2062 = vld [vmem:[%s11] sm:$0xff]
            %v2063 = vld [vmem:[%s11 + $0x8] sm:$0xff]
            %v2064 = vld [vmem:[%s12] sm:$0x1]
            %v2066 = vperm.slane %v2064, 0
            %vm2068 = vcmask 130048
            %v2070 = vsel %vm2068, %v2061, 0
            %2072 = vmatpush.msra.mxu0 0.0
            %2073 = vmatpush.msra.mxu0 0.0
            %2074 = vmatpush.msra.mxu0 0.0
            %2075 = vmatpush.msra.mxu0 0.0
            %2076 = vmatpush.msra.mxu0 0.0
            %2077 = vmatpush.msra.mxu0 0.0
            %2078 = vmatpush.msra.mxu0 0.0
            %2079 = vmatpush.msra.mxu0 0.0
            %2080 = vmatpush.msra.mxu0 0.0
            %2081 = vmatpush.msra.mxu0 0.0
            %2082 = vmatpush.msra.mxu0 0.0
            %2083 = vmatpush.msra.mxu0 0.0
            %2084 = vmatpush.msra.mxu0 0.0
            %2085 = vmatpush.msra.mxu0 0.0
            %2086 = vmatpush.msra.mxu0 %v2063
            %2087 = vmatpush.msra.mxu0 %v2062
            %2088 = vmatmul.f32.gmra.mxu0 %v2070
            %v2089 = vpop.f32.mrf.mxu0
            %v2090 = vadd.f32 %v2066, %v2089
            %2091 = vdwg.mxu0
            %vm2092 = vcmask 25600
            %2093 = vst.msk [vmem:[#allocation10] sm:$0x3] %vm2092, %v2090
          $region100: #{complex_gat_forward.1} parent=95 // pred_fallthru
            _
        $region96: #{complex_gat_forward.1} parent=79 // pred_fallthru
          _
        // Predicated region
        $region101: #{complex_gat_forward.1} parent=79 // pred_check
          %p2094 = pneg %p372
        $region102: #{complex_gat_forward.1} parent=79 // pred_check_branch
          %2096 = sbr.rel (%p2094) target = $region104
        $region103: #{complex_gat_forward.1} parent=79 // pred_region
          %2098 = vsyncadd [#allocation11], 0
          %s2100 = sshll.u32 [#allocation10], 4
          %s2101 = int_to_ptr.vmem [resolvable:$true] %s2100
          %s2102 = sshll.u32 %s15, 4
          %s2103 = int_to_ptr.hbm [resolvable:$true] %s2102
          %2105 = dma.vmem_to_hbm [thread:$0]  %s2101, 32, %s2103, [#allocation11]
        $region104: #{complex_gat_forward.1} parent=79 // pred_fallthru
          _
        // Predicated region
        $region105: #{complex_gat_forward.1} parent=79 // pred_check
          %p2106 = pneg %p372
        $region106: #{complex_gat_forward.1} parent=79 // pred_check_branch
          %2108 = sbr.rel (%p2106) target = $region108
        $region107: #{complex_gat_forward.1} parent=79 // pred_region
          %2110 = dma.done [#allocation11], 32
        $region108: #{complex_gat_forward.1} parent=79 // pred_fallthru
          _
      $region80: #{complex_gat_forward.1} parent=5 // pred_fallthru
        _
      %p2111 = scmp.le.s32.totalorder 2, %s22
      // Predicated region
      $region109: #{complex_gat_forward.1} parent=5 // pred_check
        %p2112 = pneg %p2111
      $region110: #{complex_gat_forward.1} parent=5 // pred_check_branch
        %2114 = sbr.rel (%p2112) target = $region112
      $region111: #{complex_gat_forward.1} parent=5 // pred_region
        %s2115 = ssub.s32 %s22, 2
      $region112: #{complex_gat_forward.1} parent=5 // pred_fallthru
        _
    $region6: #{complex_gat_forward.1} parent=1 // loop_footer
      %s26 = sadd.s32 1, %s22
    $region7: #{complex_gat_forward.1} parent=1 // loop_footer_branch
      %21 = sbr.rel target = $region3
    $region8: #{complex_gat_forward.1} parent=1 // loop_exit
      _
    %2116 = vsyncpa [#allocation11], 1
    %s2117 = scalar_lea.sflag [#allocation11], 1
    %2118 = vsyncpa %s2117, 1

</llo_original>
